<compile_context>
chip_gen: v6e
topology: v6e:2x2x1
jax: 0.10.0
libtpu: 0.0.40
codegen_flags: <defaults>
</compile_context>

<pallas_src>
import math
from functools import partial

import jax
import jax.numpy as jnp
from jax.experimental import pallas as pl
from jax.experimental.pallas import tpu as pltpu

FREQ_EMB_SIZE = 256          # frequency_embedding_size (module default)
HIDDEN_SIZE = 32             # hidden_size (small, consistent with module)
MAX_PERIOD = 10000.0

_HIGHEST = jax.lax.Precision.HIGHEST


def _round_up(x, m):
    return ((x + m - 1) // m) * m


# ----------------------------------------------------------------------------
# Kernel
# ----------------------------------------------------------------------------
def time_embedding_kernel(t_ref, freqs_ref, w1c_ref, w1s_ref, b1_ref,
                          w2_ref, b2_ref, out_ref):
    # Sinusoidal features, entirely in f32 (phase accuracy for t up to ~1000;
    # v5e has no bf16 VPU/EUP anyway).  freqs is a resident (1, 128) input.
    args = t_ref[...] * freqs_ref[...]           # (tile_n, 1) * (1, 128)
    cos_a = jnp.cos(args)
    sin_a = jnp.sin(args)

    # First Linear as split-K over the [cos | sin] halves — no lane concat,
    # two K=128 matmuls accumulating in f32 on the MXU.  fp32 contract
    # precision: the MXU has huge slack here, so full precision is free.
    h = jnp.dot(cos_a, w1c_ref[...],
                preferred_element_type=jnp.float32, precision=_HIGHEST)
    h = h + jnp.dot(sin_a, w1s_ref[...],
                    preferred_element_type=jnp.float32, precision=_HIGHEST)
    h = h + b1_ref[...]
    h = h * jax.nn.sigmoid(h)                    # SiLU (EUP sigmoid), f32

    # Second Linear: output dim zero-padded to 128 lanes -> unmasked vst.
    out_ref[...] = (jnp.dot(h, w2_ref[...],
                            preferred_element_type=jnp.float32,
                            precision=_HIGHEST)
                    + b2_ref[...])


# ----------------------------------------------------------------------------
# One-time parameter preparation (hoisted out of the per-call path)
# ----------------------------------------------------------------------------
def prepare_params(w1, b1, w2, b2):
    """One-time weight prep (do NOT call per forward step).

    w1: (256, hidden), b1: (hidden,), w2: (hidden, hidden), b2: (hidden,)
    — weights stored as (in, out) == transpose of nn.Linear.weight.

    Returns a tuple of arrays consumed by time_embedding_forward*():
      freqs (1,128) f32, W1 cos/sin halves (128,H) f32, b1 (1,H) f32,
      W2 zero-padded to lane-dense (H, 128k) f32, b2 padded to (1, 128k) f32.
    """
    assert w1.shape[0] == FREQ_EMB_SIZE
    half = FREQ_EMB_SIZE // 2
    hidden = w1.shape[1]
    out_w = _round_up(hidden, 128)

    freqs = jnp.exp(-math.log(MAX_PERIOD)
                    * jnp.arange(0, half, dtype=jnp.float32) / half
                    ).reshape(1, half)
    w1c = w1[:half].astype(jnp.float32)                        # (128, hidden)
    w1s = w1[half:].astype(jnp.float32)                        # (128, hidden)
    b1_2 = b1.reshape(1, hidden).astype(jnp.float32)
    w2_p = jnp.zeros((hidden, out_w), jnp.float32).at[:, :hidden].set(
        w2.astype(jnp.float32))
    b2_p = jnp.zeros((1, out_w), jnp.float32).at[0, :hidden].set(
        b2.astype(jnp.float32))
    return (freqs, w1c, w1s, b1_2, w2_p, b2_p)


# ----------------------------------------------------------------------------
# Forward
# ----------------------------------------------------------------------------
@partial(jax.jit, static_argnames=("row_tile",))
def time_embedding_forward_padded(t, params, *, row_tile=1024):
    """t: () or (N,) float32.  Returns padded (n_pad, 128k) f32; the real
    embedding occupies rows [:N] and lanes [:hidden].  This is the
    slice-free form recommended for fused consumers (no extra HBM pass)."""
    freqs, w1c, w1s, b1_2, w2_p, b2_p = params
    if t.ndim == 0:
        t = t[None]
    n = t.shape[0]
    out_w = w2_p.shape[1]

    # Row tile: multiple of 8, capped at row_tile; pad N to whole tiles so
    # every block is full (deterministic, no partial-block reads).
    tile_n = max(8, min(_round_up(row_tile, 8), _round_up(n, 8)))
    n_pad = _round_up(n, tile_n)
    # If the grid would be a single step, split it in two so the "parallel"
    # axis can shard across v7x's two TensorCores (one extra ~0.35 µs step
    # elsewhere — harmless on v5e/v6e).
    if n_pad // tile_n == 1 and tile_n >= 16:
        tile_n = _round_up((n_pad + 1) // 2, 8)
        n_pad = _round_up(n, tile_n)

    t_pad = jnp.pad(t.astype(jnp.float32), (0, n_pad - n)).reshape(n_pad, 1)

    resident = lambda arr: pl.BlockSpec(arr.shape, lambda i: (0, 0))

    return pl.pallas_call(
        time_embedding_kernel,
        out_shape=jax.ShapeDtypeStruct((n_pad, out_w), jnp.float32),
        grid=(n_pad // tile_n,),
        in_specs=[
            pl.BlockSpec((tile_n, 1), lambda i: (i, 0)),   # t rows (pipelined)
            resident(freqs),                               # (1,128) resident
            resident(w1c), resident(w1s), resident(b1_2),  # weights/biases
            resident(w2_p), resident(b2_p),                # stay in VMEM
        ],
        out_specs=pl.BlockSpec((tile_n, out_w), lambda i: (i, 0)),
        compiler_params=pltpu.CompilerParams(
            dimension_semantics=("parallel",)),
    )(t_pad, freqs, w1c, w1s, b1_2, w2_p, b2_p)


def time_embedding_forward(t, params, *, row_tile=1024):
    """Convenience wrapper returning (N, hidden) f32.

    NOTE: the final slice costs one extra HBM pass; performance-sensitive
    callers should consume time_embedding_forward_padded directly (read the
    first `hidden` lanes) or fuse this op into the consumer."""
    n = 1 if t.ndim == 0 else t.shape[0]
    hidden = params[1].shape[1]          # w1c: (128, hidden)
    out = time_embedding_forward_padded(t, params, row_tile=row_tile)
    return out[:n, :hidden]


# ----------------------------------------------------------------------------
# Init + pure-JAX reference
# ----------------------------------------------------------------------------
def init_params(key, freq_dim=FREQ_EMB_SIZE, hidden=HIDDEN_SIZE):
    """PyTorch-Linear-style init (uniform(-1/sqrt(fan_in), +1/sqrt(fan_in))).
    Weights stored as (in, out) == transpose of nn.Linear.weight."""
    k1, k2, k3, k4 = jax.random.split(key, 4)
    bound1 = 1.0 / math.sqrt(freq_dim)
    bound2 = 1.0 / math.sqrt(hidden)
    w1 = jax.random.uniform(k1, (freq_dim, hidden), jnp.float32,
                            -bound1, bound1)
    b1 = jax.random.uniform(k2, (hidden,), jnp.float32, -bound1, bound1)
    w2 = jax.random.uniform(k3, (hidden, hidden), jnp.float32,
                            -bound2, bound2)
    b2 = jax.random.uniform(k4, (hidden,), jnp.float32, -bound2, bound2)
    return w1, b1, w2, b2


def reference_forward_f32(t, w1, b1, w2, b2):
    """Pure-JAX f32 reference mirroring the PyTorch module exactly
    (HIGHEST precision so XLA does not quietly reduce the f32 dots)."""
    half = FREQ_EMB_SIZE // 2
    freqs = jnp.exp(-math.log(MAX_PERIOD)
                    * jnp.arange(0, half, dtype=jnp.float32) / half)
    args = t.astype(jnp.float32)[:, None] * freqs[None]
    emb = jnp.concatenate([jnp.cos(args), jnp.sin(args)], axis=-1)
    h = jnp.dot(emb, w1, precision=_HIGHEST) + b1
    h = h * jax.nn.sigmoid(h)
    return jnp.dot(h, w2, precision=_HIGHEST) + b2


# ----------------------------------------------------------------------------
if __name__ == "__main__":
    key = jax.random.PRNGKey(0)
    k_t, k_p = jax.random.split(key)

    w1, b1, w2, b2 = init_params(k_p)
    # One-time parameter prep (hoisted out of the per-call forward path).
    params = prepare_params(w1, b1, w2, b2)

    # Small batch of (possibly fractional) timesteps.
    N = 8
    t = jax.random.uniform(k_t, (N,), jnp.float32, 0.0, 1000.0)
    out = jax.block_until_ready(time_embedding_forward(t, params))
    assert out.shape == (N, HIDDEN_SIZE)
    ref = reference_forward_f32(t, w1, b1, w2, b2)
    assert jnp.allclose(out, ref, atol=2e-3, rtol=2e-3), (
        "max abs err = %g" % float(jnp.max(jnp.abs(out - ref))))

    # Larger batch: multi-step parallel grid + the padded (slice-free) output
    # path recommended for fused consumers.
    N2 = 300
    t_big = jax.random.uniform(k_t, (N2,), jnp.float32, 0.0, 1000.0)
    out_pad = jax.block_until_ready(
        time_embedding_forward_padded(t_big, params, row_tile=128))
    assert out_pad.shape[1] % 128 == 0
    ref2 = reference_forward_f32(t_big, w1, b1, w2, b2)
    assert jnp.allclose(out_pad[:N2, :HIDDEN_SIZE], ref2, atol=2e-3, rtol=2e-3)

    # Scalar-t path (module accepts a 0-d timestep).
    out_s = jax.block_until_ready(
        time_embedding_forward(jnp.float32(37.0), params))
    assert out_s.shape == (1, HIDDEN_SIZE)

    print("KERNEL_OK")
</pallas_src>

<mosaic_0001>
module attributes {stable_mosaic.version = 11 : i64} {
  func.func @time_embedding_kernel(%arg0: i32, %arg1: memref<8x1xf32, #tpu.memory_space<vmem>>, %arg2: memref<1x128xf32, #tpu.memory_space<vmem>>, %arg3: memref<128x32xf32, #tpu.memory_space<vmem>>, %arg4: memref<128x32xf32, #tpu.memory_space<vmem>>, %arg5: memref<1x32xf32, #tpu.memory_space<vmem>>, %arg6: memref<32x128xf32, #tpu.memory_space<vmem>>, %arg7: memref<1x128xf32, #tpu.memory_space<vmem>>, %arg8: memref<8x128xf32, #tpu.memory_space<vmem>>) attributes {dimension_semantics = [#tpu.dimension_semantics<parallel>], iteration_bounds = array<i64: 1>, scalar_prefetch = 0 : i64, scratch_operands = 0 : i64, tpu.core_type = #tpu.core_type<tc>, window_params = [{transform_indices = @transform_0, window_bounds = array<i64: 8, 1>}, {pipeline_mode = #tpu.pipeline_mode<synchronous>, transform_indices = @transform_1, window_bounds = array<i64: 1, 128>}, {pipeline_mode = #tpu.pipeline_mode<synchronous>, transform_indices = @transform_2, window_bounds = array<i64: 128, 32>}, {pipeline_mode = #tpu.pipeline_mode<synchronous>, transform_indices = @transform_3, window_bounds = array<i64: 128, 32>}, {pipeline_mode = #tpu.pipeline_mode<synchronous>, transform_indices = @transform_4, window_bounds = array<i64: 1, 32>}, {pipeline_mode = #tpu.pipeline_mode<synchronous>, transform_indices = @transform_5, window_bounds = array<i64: 32, 128>}, {pipeline_mode = #tpu.pipeline_mode<synchronous>, transform_indices = @transform_6, window_bounds = array<i64: 1, 128>}, {transform_indices = @transform_7, window_bounds = array<i64: 8, 128>}]} {
    %c0 = arith.constant 0 : index
    %c0_0 = arith.constant 0 : index
    %0 = vector.load %arg1[%c0, %c0_0] : memref<8x1xf32, #tpu.memory_space<vmem>>, vector<8x1xf32>
    %c0_1 = arith.constant 0 : index
    %c0_2 = arith.constant 0 : index
    %1 = vector.load %arg2[%c0_1, %c0_2] : memref<1x128xf32, #tpu.memory_space<vmem>>, vector<1x128xf32>
    %2 = vector.broadcast %0 : vector<8x1xf32> to vector<8x128xf32>
    %3 = vector.broadcast %1 : vector<1x128xf32> to vector<8x128xf32>
    %4 = arith.mulf %2, %3 : vector<8x128xf32>
    %5 = math.cos %4 : vector<8x128xf32>
    %6 = math.sin %4 : vector<8x128xf32>
    %c0_3 = arith.constant 0 : index
    %c0_4 = arith.constant 0 : index
    %7 = vector.load %arg3[%c0_3, %c0_4] : memref<128x32xf32, #tpu.memory_space<vmem>>, vector<128x32xf32>
    %cst = arith.constant dense<0.000000e+00> : vector<8x32xf32>
    %8 = tpu.matmul %5, %7, %cst {dimension_numbers = #tpu.dot_dimension_numbers<[1], [0], [0], [1], [0, 0, 1, 1], [], []>, precision = #tpu.contract_precision<fp32>} : vector<8x128xf32>, vector<128x32xf32>, vector<8x32xf32> -> vector<8x32xf32>
    %c0_5 = arith.constant 0 : index
    %c0_6 = arith.constant 0 : index
    %9 = vector.load %arg4[%c0_5, %c0_6] : memref<128x32xf32, #tpu.memory_space<vmem>>, vector<128x32xf32>
    %cst_7 = arith.constant dense<0.000000e+00> : vector<8x32xf32>
    %10 = tpu.matmul %6, %9, %cst_7 {dimension_numbers = #tpu.dot_dimension_numbers<[1], [0], [0], [1], [0, 0, 1, 1], [], []>, precision = #tpu.contract_precision<fp32>} : vector<8x128xf32>, vector<128x32xf32>, vector<8x32xf32> -> vector<8x32xf32>
    %11 = arith.addf %8, %10 : vector<8x32xf32>
    %c0_8 = arith.constant 0 : index
    %c0_9 = arith.constant 0 : index
    %12 = vector.load %arg5[%c0_8, %c0_9] : memref<1x32xf32, #tpu.memory_space<vmem>>, vector<1x32xf32>
    %13 = vector.broadcast %12 : vector<1x32xf32> to vector<8x32xf32>
    %14 = arith.addf %11, %13 : vector<8x32xf32>
    %15 = arith.negf %14 : vector<8x32xf32>
    %16 = math.exp %15 : vector<8x32xf32>
    %cst_10 = arith.constant 1.000000e+00 : f32
    %17 = vector.broadcast %cst_10 : f32 to vector<8x32xf32>
    %18 = arith.addf %17, %16 : vector<8x32xf32>
    %19 = arith.divf %17, %18 : vector<8x32xf32>
    %20 = arith.mulf %14, %19 : vector<8x32xf32>
    %c0_11 = arith.constant 0 : index
    %c0_12 = arith.constant 0 : index
    %21 = vector.load %arg6[%c0_11, %c0_12] : memref<32x128xf32, #tpu.memory_space<vmem>>, vector<32x128xf32>
    %cst_13 = arith.constant dense<0.000000e+00> : vector<8x128xf32>
    %22 = tpu.matmul %20, %21, %cst_13 {dimension_numbers = #tpu.dot_dimension_numbers<[1], [0], [0], [1], [0, 0, 1, 1], [], []>, precision = #tpu.contract_precision<fp32>} : vector<8x32xf32>, vector<32x128xf32>, vector<8x128xf32> -> vector<8x128xf32>
    %c0_14 = arith.constant 0 : index
    %c0_15 = arith.constant 0 : index
    %23 = vector.load %arg7[%c0_14, %c0_15] : memref<1x128xf32, #tpu.memory_space<vmem>>, vector<1x128xf32>
    %24 = vector.broadcast %23 : vector<1x128xf32> to vector<8x128xf32>
    %25 = arith.addf %22, %24 : vector<8x128xf32>
    %c0_16 = arith.constant 0 : index
    %c0_17 = arith.constant 0 : index
    %26 = vector.load %arg8[%c0_16, %c0_17] : memref<8x128xf32, #tpu.memory_space<vmem>>, vector<8x128xf32>
    tpu.vector_store %arg8[%c0_16, %c0_17], %25 {strides = array<i32>} : memref<8x128xf32, #tpu.memory_space<vmem>>, vector<8x128xf32>,
    return
  }
  func.func @transform_0(%arg0: i32) -> (i32, i32) {
    %c0_i32 = arith.constant 0 : i32
    %c0_i32_0 = arith.constant 0 : i32
    return %arg0, %c0_i32 : i32, i32
  }
  func.func @transform_1(%arg0: i32) -> (i32, i32) {
    %c0_i32 = arith.constant 0 : i32
    %c0_i32_0 = arith.constant 0 : i32
    %c0_i32_1 = arith.constant 0 : i32
    return %c0_i32, %c0_i32_0 : i32, i32
  }
  func.func @transform_2(%arg0: i32) -> (i32, i32) {
    %c0_i32 = arith.constant 0 : i32
    %c0_i32_0 = arith.constant 0 : i32
    %c0_i32_1 = arith.constant 0 : i32
    return %c0_i32, %c0_i32_0 : i32, i32
  }
  func.func @transform_3(%arg0: i32) -> (i32, i32) {
    %c0_i32 = arith.constant 0 : i32
    %c0_i32_0 = arith.constant 0 : i32
    %c0_i32_1 = arith.constant 0 : i32
    return %c0_i32, %c0_i32_0 : i32, i32
  }
  func.func @transform_4(%arg0: i32) -> (i32, i32) {
    %c0_i32 = arith.constant 0 : i32
    %c0_i32_0 = arith.constant 0 : i32
    %c0_i32_1 = arith.constant 0 : i32
    return %c0_i32, %c0_i32_0 : i32, i32
  }
  func.func @transform_5(%arg0: i32) -> (i32, i32) {
    %c0_i32 = arith.constant 0 : i32
    %c0_i32_0 = arith.constant 0 : i32
    %c0_i32_1 = arith.constant 0 : i32
    return %c0_i32, %c0_i32_0 : i32, i32
  }
  func.func @transform_6(%arg0: i32) -> (i32, i32) {
    %c0_i32 = arith.constant 0 : i32
    %c0_i32_0 = arith.constant 0 : i32
    %c0_i32_1 = arith.constant 0 : i32
    return %c0_i32, %c0_i32_0 : i32, i32
  }
  func.func @transform_7(%arg0: i32) -> (i32, i32) {
    %c0_i32 = arith.constant 0 : i32
    %c0_i32_0 = arith.constant 0 : i32
    return %arg0, %c0_i32 : i32, i32
  }
}

</mosaic_0001>

<llo_original>
// kernel: time_embedding_forward_padded.1
$region0: #{time_embedding_forward_padded.1}
  #allocation0 [shape = 'u32[]', space=smem, size = 0x4, offset = 0x4, fixed_abs, tag = 'smem constant byte address 0x4 - core index']
  #allocation1 [shape = 'u32[144,128]{1,0:T(1,128)}', space=vmem, size = 0x12000, scoped, tag = 'internal scratch']
  %s0 = inlined_call_operand.vmem [shape: f32[8,1], index: 0, kind: input, shape index: {}]
  %s1 = inlined_call_operand.vmem [shape: f32[1,128], index: 1, kind: input, shape index: {}]
  %s2 = inlined_call_operand.vmem [shape: f32[128,32], index: 2, kind: input, shape index: {}]
  %s3 = inlined_call_operand.vmem [shape: f32[128,32], index: 3, kind: input, shape index: {}]
  %s4 = inlined_call_operand.vmem [shape: f32[1,32], index: 4, kind: input, shape index: {}]
  %s5 = inlined_call_operand.vmem [shape: f32[32,128], index: 5, kind: input, shape index: {}]
  %s6 = inlined_call_operand.vmem [shape: f32[1,128], index: 6, kind: input, shape index: {}]
  %s7 = inlined_call_operand.hbm [shape: f32[8,128], index: 7, kind: output, shape index: {}]
  %s8 = sld [smem:[#allocation0]]
  $region38: #{time_embedding_forward_padded.1} parent=0
    _
  %s10 = ssub.s32 1, %s8
  %s11 = scalar_select 0, %s10, %s8
  $region1: #{time_embedding_forward_padded.1} parent=0
    #allocation2 [shape = 'u8[4096]{0}', space=vmem, size = 0x1000, scoped, tag = 'output window, operand 0, single buffered']
    #allocation3 [shape = 's32[1]{0}', space=sflag, size = 0x4, scoped, tag = 'scoped memory for time_embedding_forward_padded.1']
    %12 = vsyncpa [#allocation3], 0
    // Predicated region
    $region2: #{time_embedding_forward_padded.1} parent=1 // pred_check
      _
    $region3: #{time_embedding_forward_padded.1} parent=1 // pred_check_branch
      %14 = sbr.rel (0) target = $region5
    $region4: #{time_embedding_forward_padded.1} parent=1 // pred_region
      _
    $region5: #{time_embedding_forward_padded.1} parent=1 // pred_fallthru
      _
    // Predicated region
    $region6: #{time_embedding_forward_padded.1} parent=1 // pred_check
      _
    $region7: #{time_embedding_forward_padded.1} parent=1 // pred_check_branch
      %16 = sbr.rel (0) target = $region9
    $region8: #{time_embedding_forward_padded.1} parent=1 // pred_region
      _
    $region9: #{time_embedding_forward_padded.1} parent=1 // pred_fallthru
      _
    // Predicated region
    $region10: #{time_embedding_forward_padded.1} parent=1 // pred_check
      _
    $region11: #{time_embedding_forward_padded.1} parent=1 // pred_check_branch
      %18 = sbr.rel (0) target = $region13
    $region12: #{time_embedding_forward_padded.1} parent=1 // pred_region
      _
    $region13: #{time_embedding_forward_padded.1} parent=1 // pred_fallthru
      _
    // Predicated region
    $region14: #{time_embedding_forward_padded.1} parent=1 // pred_check
      _
    $region15: #{time_embedding_forward_padded.1} parent=1 // pred_check_branch
      %20 = sbr.rel (0) target = $region17
    $region16: #{time_embedding_forward_padded.1} parent=1 // pred_region
      _
    $region17: #{time_embedding_forward_padded.1} parent=1 // pred_fallthru
      _
    // Predicated region
    $region18: #{time_embedding_forward_padded.1} parent=1 // pred_check
      _
    $region19: #{time_embedding_forward_padded.1} parent=1 // pred_check_branch
      %22 = sbr.rel (0) target = $region21
    $region20: #{time_embedding_forward_padded.1} parent=1 // pred_region
      _
    $region21: #{time_embedding_forward_padded.1} parent=1 // pred_fallthru
      _
    // Predicated region
    $region22: #{time_embedding_forward_padded.1} parent=1 // pred_check
      _
    $region23: #{time_embedding_forward_padded.1} parent=1 // pred_check_branch
      %24 = sbr.rel (0) target = $region25
    $region24: #{time_embedding_forward_padded.1} parent=1 // pred_region
      _
    $region25: #{time_embedding_forward_padded.1} parent=1 // pred_fallthru
      _
    // Predicated region
    $region26: #{time_embedding_forward_padded.1} parent=1 // pred_check
      _
    $region27: #{time_embedding_forward_padded.1} parent=1 // pred_check_branch
      %26 = sbr.rel (0) target = $region29
    $region28: #{time_embedding_forward_padded.1} parent=1 // pred_region
      _
    $region29: #{time_embedding_forward_padded.1} parent=1 // pred_fallthru
      _
    %v27 = vld [vmem:[%s0] sm:$0xff]
    %v28 = vld [vmem:[%s1] sm:$0x1]
    %30 = vset.pattern.permute.xlu0 0
    %31 = vperm.xlu0 %30, %v27
    %v32 = vpop.permute.xlu0 %31
    %v35 = vlaneseq
    %v36 = vshrl.u32 %v35, 7
    %v37 = vsub.s32 0, %v36
    %v38 = vrot.slane %v28, %v37
    %v40 = vmul.f32 %v32, %v38
    %v41 = vand.u32 2147483647, %v40
    %vm42 = vcmp.le.f32.partialorder %v41, 0.7853982
    %vm43 = vcmp.lt.s32.totalorder %v40, 0
    %v44 = vand.u32 %v40, 2139095040
    %v45 = vshrl.u32 %v44, 23
    %v46 = vsub.s32 %v45, 127
    %v47 = vand.u32 2147483647, %v40
    %v48 = vand.u32 %v47, 8388607
    %v49 = vor.u32 %v48, 8388608
    %v50 = vsub.s32 0, %v49
    %v51 = vadd.s32 %v46, 1
    %vm52 = vcmp.gt.s32.totalorder %v51, 0
    %v53 = vsel %vm52, %v51, 0
    %v54 = vshrl.u32 %v53, 5
    %v55 = vand.u32 %v53, 31
    %v56 = vsub.s32 32, %v55
    %v57 = vshrl.u32 683565275, %v56
    %v58 = vshll.u32 683565275, %v55
    %v59 = vshrl.u32 2475754826, %v56
    %v60 = vor.u32 %v58, %v59
    %v61 = vshll.u32 2475754826, %v55
    %v62 = vshrl.u32 2131351028, %v56
    %v63 = vor.u32 %v61, %v62
    %v64 = vshll.u32 2131351028, %v55
    %v65 = vshrl.u32 2102212464, %v56
    %v66 = vor.u32 %v64, %v65
    %v67 = vshll.u32 2102212464, %v55
    %v68 = vshrl.u32 920167782, %v56
    %v69 = vor.u32 %v67, %v68
    %v70 = vshll.u32 920167782, %v55
    %v71 = vshrl.u32 1326507024, %v56
    %v72 = vor.u32 %v70, %v71
    %vm73 = vcmp.lt.s32.totalorder %v54, 1
    %vm74 = vcmp.lt.s32.totalorder %v54, 2
    %vm75 = vcmp.lt.s32.totalorder %v54, 3
    %vm76 = vcmp.lt.s32.totalorder %v54, 4
    %v77 = vsel %vm73, %v57, %v60
    %v78 = vsel %vm76, %v66, 2102212464
    %v79 = vsel %vm75, %v63, %v78
    %v80 = vsel %vm74, %v77, %v79
    %v81 = vsel %vm73, %v60, %v63
    %v82 = vsel %vm76, %v69, 920167782
    %v83 = vsel %vm75, %v66, %v82
    %v84 = vsel %vm74, %v81, %v83
    %v85 = vsel %vm73, %v63, %v66
    %v86 = vsel %vm76, %v72, 1326507024
    %v87 = vsel %vm75, %v69, %v86
    %v88 = vsel %vm74, %v85, %v87
    %v89 = vshll.u32 %v49, 8
    %v90 = vmul.u32.u64.compose %v89, %v88
    %v91 = vextract.low.u32 %v90
    %v92 = vextract.high.u32 %v90
    %v93 = vmul.u32.u64.compose %v89, %v84
    %v94 = vextract.low.u32 %v93
    %v95 = vextract.high.u32 %v93
    %v96 = vmul.u32 %v89, %v80
    %v97 = vadd.s32 %v92, %v94
    %vm98 = vc.u32 %v92, %v94
    %v99 = vadd.s32 %v95, 1
    %v100 = vsel %vm98, %v99, %v95
    %v101 = vadd.s32 %v96, %v100
    %v102 = vadd.s32 %v101, 536870912
    %v103 = vshrl.u32 %v102, 30
    %v104 = vshll.u32 %v103, 30
    %v105 = vsub.s32 %v101, %v104
    %vm106 = vcmp.lt.s32.totalorder %v105, 0
    %v107 = vsub.s32 0, %v105
    %v108 = vsel %vm106, %v107, %v105
    %v109 = vclz %v108
    %v110 = vsub.s32 %v109, 2
    %vm111 = vcmp.gt.s32.totalorder 0, %v110
    %v112 = vsel %vm111, 0, %v110
    %v113 = vsub.s32 32, %v112
    %v114 = vshll.u32 %v105, %v112
    %v115 = vshrl.u32 %v97, %v113
    %v116 = vor.u32 %v114, %v115
    %v117 = vsub.s32 4294967266, %v112
    %v118 = vadd.s32 %v117, 127
    %v119 = vshll.u32 %v118, 23
    %v120 = vor.u32 4788187, %v119
    %v121 = vand.u32 2147483647, %v120
    %v123 = vcvt.s32.f32 %v116
    %v124 = vmul.f32 %v123, %v121
    %v125 = vxor.u32 %v124, 2147483648
    %v126 = vsel %vm43, %v125, %v124
    %v127 = vsub.s32 4, %v103
    %v128 = vsel %vm43, %v127, %v103
    %v129 = vsel %vm42, %v40, %v126
    %v130 = vsel %vm42, 0, %v128
    %v131 = vcosq.f32.pop %v129
    %v132 = vsinq.f32.pop %v129
    %vm133 = vweird.f32 %v40
    %v134 = vand.u32 %v130, 3
    %vm135 = vcmp.lt.s32.totalorder %v134, 2
    %vm136 = vcmp.eq.s32.totalorder %v134, 0
    %v137 = vxor.u32 %v132, 2147483648
    %v138 = vsel %vm136, %v131, %v137
    %vm139 = vcmp.eq.s32.totalorder %v134, 2
    %v140 = vxor.u32 %v131, 2147483648
    %v141 = vsel %vm139, %v140, %v132
    %v142 = vsel %vm135, %v138, %v141
    %v143 = vsel %vm133, nan, %v142
    %v144 = vand.u32 2147483647, %v40
    %vm145 = vcmp.le.f32.partialorder %v144, 0.7853982
    %vm146 = vcmp.lt.s32.totalorder %v40, 0
    %v147 = vand.u32 %v40, 2139095040
    %v148 = vshrl.u32 %v147, 23
    %v149 = vsub.s32 %v148, 127
    %v150 = vand.u32 2147483647, %v40
    %v151 = vand.u32 %v150, 8388607
    %v152 = vor.u32 %v151, 8388608
    %v153 = vsub.s32 0, %v152
    %v154 = vadd.s32 %v149, 1
    %vm155 = vcmp.gt.s32.totalorder %v154, 0
    %v156 = vsel %vm155, %v154, 0
    %v157 = vshrl.u32 %v156, 5
    %v158 = vand.u32 %v156, 31
    %v159 = vsub.s32 32, %v158
    %v160 = vshrl.u32 683565275, %v159
    %v161 = vshll.u32 683565275, %v158
    %v162 = vshrl.u32 2475754826, %v159
    %v163 = vor.u32 %v161, %v162
    %v164 = vshll.u32 2475754826, %v158
    %v165 = vshrl.u32 2131351028, %v159
    %v166 = vor.u32 %v164, %v165
    %v167 = vshll.u32 2131351028, %v158
    %v168 = vshrl.u32 2102212464, %v159
    %v169 = vor.u32 %v167, %v168
    %v170 = vshll.u32 2102212464, %v158
    %v171 = vshrl.u32 920167782, %v159
    %v172 = vor.u32 %v170, %v171
    %v173 = vshll.u32 920167782, %v158
    %v174 = vshrl.u32 1326507024, %v159
    %v175 = vor.u32 %v173, %v174
    %vm176 = vcmp.lt.s32.totalorder %v157, 1
    %vm177 = vcmp.lt.s32.totalorder %v157, 2
    %vm178 = vcmp.lt.s32.totalorder %v157, 3
    %vm179 = vcmp.lt.s32.totalorder %v157, 4
    %v180 = vsel %vm176, %v160, %v163
    %v181 = vsel %vm179, %v169, 2102212464
    %v182 = vsel %vm178, %v166, %v181
    %v183 = vsel %vm177, %v180, %v182
    %v184 = vsel %vm176, %v163, %v166
    %v185 = vsel %vm179, %v172, 920167782
    %v186 = vsel %vm178, %v169, %v185
    %v187 = vsel %vm177, %v184, %v186
    %v188 = vsel %vm176, %v166, %v169
    %v189 = vsel %vm179, %v175, 1326507024
    %v190 = vsel %vm178, %v172, %v189
    %v191 = vsel %vm177, %v188, %v190
    %v192 = vshll.u32 %v152, 8
    %v193 = vmul.u32.u64.compose %v192, %v191
    %v194 = vextract.low.u32 %v193
    %v195 = vextract.high.u32 %v193
    %v196 = vmul.u32.u64.compose %v192, %v187
    %v197 = vextract.low.u32 %v196
    %v198 = vextract.high.u32 %v196
    %v199 = vmul.u32 %v192, %v183
    %v200 = vadd.s32 %v195, %v197
    %vm201 = vc.u32 %v195, %v197
    %v202 = vadd.s32 %v198, 1
    %v203 = vsel %vm201, %v202, %v198
    %v204 = vadd.s32 %v199, %v203
    %v205 = vadd.s32 %v204, 536870912
    %v206 = vshrl.u32 %v205, 30
    %v207 = vshll.u32 %v206, 30
    %v208 = vsub.s32 %v204, %v207
    %vm209 = vcmp.lt.s32.totalorder %v208, 0
    %v210 = vsub.s32 0, %v208
    %v211 = vsel %vm209, %v210, %v208
    %v212 = vclz %v211
    %v213 = vsub.s32 %v212, 2
    %vm214 = vcmp.gt.s32.totalorder 0, %v213
    %v215 = vsel %vm214, 0, %v213
    %v216 = vsub.s32 32, %v215
    %v217 = vshll.u32 %v208, %v215
    %v218 = vshrl.u32 %v200, %v216
    %v219 = vor.u32 %v217, %v218
    %v220 = vsub.s32 4294967266, %v215
    %v221 = vadd.s32 %v220, 127
    %v222 = vshll.u32 %v221, 23
    %v223 = vor.u32 4788187, %v222
    %v224 = vand.u32 2147483647, %v223
    %v226 = vcvt.s32.f32 %v219
    %v227 = vmul.f32 %v226, %v224
    %v228 = vxor.u32 %v227, 2147483648
    %v229 = vsel %vm146, %v228, %v227
    %v230 = vsub.s32 4, %v206
    %v231 = vsel %vm146, %v230, %v206
    %v232 = vsel %vm145, %v40, %v229
    %v233 = vsel %vm145, 0, %v231
    %v234 = vcosq.f32.pop %v232
    %v235 = vsinq.f32.pop %v232
    %vm236 = vweird.f32 %v40
    %v237 = vadd.s32 %v233, 3
    %v238 = vand.u32 %v237, 3
    %vm239 = vcmp.lt.s32.totalorder %v238, 2
    %vm240 = vcmp.eq.s32.totalorder %v238, 0
    %v241 = vxor.u32 %v235, 2147483648
    %v242 = vsel %vm240, %v234, %v241
    %vm243 = vcmp.eq.s32.totalorder %v238, 2
    %v244 = vxor.u32 %v234, 2147483648
    %v245 = vsel %vm243, %v244, %v235
    %v246 = vsel %vm239, %v242, %v245
    %v247 = vsel %vm236, nan, %v246
    %v248 = vld [vmem:[%s2] sm:$0xff]
    %v249 = vld [vmem:[%s2 + $0x8] sm:$0xff]
    %v250 = vld [vmem:[%s2 + $0x10] sm:$0xff]
    %v251 = vld [vmem:[%s2 + $0x18] sm:$0xff]
    %v252 = vld [vmem:[%s2 + $0x20] sm:$0xff]
    %v253 = vld [vmem:[%s2 + $0x28] sm:$0xff]
    %v254 = vld [vmem:[%s2 + $0x30] sm:$0xff]
    %v255 = vld [vmem:[%s2 + $0x38] sm:$0xff]
    %v256 = vld [vmem:[%s2 + $0x40] sm:$0xff]
    %v257 = vld [vmem:[%s2 + $0x48] sm:$0xff]
    %v258 = vld [vmem:[%s2 + $0x50] sm:$0xff]
    %v259 = vld [vmem:[%s2 + $0x58] sm:$0xff]
    %v260 = vld [vmem:[%s2 + $0x60] sm:$0xff]
    %v261 = vld [vmem:[%s2 + $0x68] sm:$0xff]
    %v262 = vld [vmem:[%s2 + $0x70] sm:$0xff]
    %v263 = vld [vmem:[%s2 + $0x78] sm:$0xff]
    %v264 = vld [vmem:[%s3] sm:$0xff]
    %v265 = vld [vmem:[%s3 + $0x8] sm:$0xff]
    %v266 = vld [vmem:[%s3 + $0x10] sm:$0xff]
    %v267 = vld [vmem:[%s3 + $0x18] sm:$0xff]
    %v268 = vld [vmem:[%s3 + $0x20] sm:$0xff]
    %v269 = vld [vmem:[%s3 + $0x28] sm:$0xff]
    %v270 = vld [vmem:[%s3 + $0x30] sm:$0xff]
    %v271 = vld [vmem:[%s3 + $0x38] sm:$0xff]
    %v272 = vld [vmem:[%s3 + $0x40] sm:$0xff]
    %v273 = vld [vmem:[%s3 + $0x48] sm:$0xff]
    %v274 = vld [vmem:[%s3 + $0x50] sm:$0xff]
    %v275 = vld [vmem:[%s3 + $0x58] sm:$0xff]
    %v276 = vld [vmem:[%s3 + $0x60] sm:$0xff]
    %v277 = vld [vmem:[%s3 + $0x68] sm:$0xff]
    %v278 = vld [vmem:[%s3 + $0x70] sm:$0xff]
    %v279 = vld [vmem:[%s3 + $0x78] sm:$0xff]
    %280 = vmatprep.subr.mxu0 0.0
    %v281 = vand.u32 %v279, 4294901760
    %282 = vmatpush1.msra.mxu0 %v281
    %283 = vmatprep.subr.mxu0 0.0
    %v284 = vand.u32 %v278, 4294901760
    %285 = vmatpush1.msra.mxu0 %v284
    %286 = vmatprep.subr.mxu0 0.0
    %v287 = vand.u32 %v277, 4294901760
    %288 = vmatpush1.msra.mxu0 %v287
    %289 = vmatprep.subr.mxu0 0.0
    %v290 = vand.u32 %v276, 4294901760
    %291 = vmatpush1.msra.mxu0 %v290
    %292 = vmatprep.subr.mxu0 0.0
    %v293 = vand.u32 %v275, 4294901760
    %294 = vmatpush1.msra.mxu0 %v293
    %295 = vmatprep.subr.mxu0 0.0
    %v296 = vand.u32 %v274, 4294901760
    %297 = vmatpush1.msra.mxu0 %v296
    %298 = vmatprep.subr.mxu0 0.0
    %v299 = vand.u32 %v273, 4294901760
    %300 = vmatpush1.msra.mxu0 %v299
    %301 = vmatprep.subr.mxu0 0.0
    %v302 = vand.u32 %v272, 4294901760
    %303 = vmatpush1.msra.mxu0 %v302
    %304 = vmatprep.subr.mxu0 0.0
    %v305 = vand.u32 %v271, 4294901760
    %306 = vmatpush1.msra.mxu0 %v305
    %307 = vmatprep.subr.mxu0 0.0
    %v308 = vand.u32 %v270, 4294901760
    %309 = vmatpush1.msra.mxu0 %v308
    %310 = vmatprep.subr.mxu0 0.0
    %v311 = vand.u32 %v269, 4294901760
    %312 = vmatpush1.msra.mxu0 %v311
    %313 = vmatprep.subr.mxu0 0.0
    %v314 = vand.u32 %v268, 4294901760
    %315 = vmatpush1.msra.mxu0 %v314
    %316 = vmatprep.subr.mxu0 0.0
    %v317 = vand.u32 %v267, 4294901760
    %318 = vmatpush1.msra.mxu0 %v317
    %319 = vmatprep.subr.mxu0 0.0
    %v320 = vand.u32 %v266, 4294901760
    %321 = vmatpush1.msra.mxu0 %v320
    %322 = vmatprep.subr.mxu0 0.0
    %v323 = vand.u32 %v265, 4294901760
    %324 = vmatpush1.msra.mxu0 %v323
    %325 = vmatprep.subr.mxu0 0.0
    %v326 = vand.u32 %v264, 4294901760
    %327 = vmatpush1.msra.mxu0 %v326
    %328 = vmatprep.subr.mxu0 0.0
    %329 = vmatpush2.msra.mxu0 0.0
    %330 = vmatprep.subr.mxu0 0.0
    %331 = vmatpush2.msra.mxu0 0.0
    %332 = vmatprep.subr.mxu0 0.0
    %333 = vmatpush2.msra.mxu0 0.0
    %334 = vmatprep.subr.mxu0 0.0
    %335 = vmatpush2.msra.mxu0 0.0
    %336 = vmatprep.subr.mxu0 0.0
    %337 = vmatpush2.msra.mxu0 0.0
    %338 = vmatprep.subr.mxu0 0.0
    %339 = vmatpush2.msra.mxu0 0.0
    %340 = vmatprep.subr.mxu0 0.0
    %341 = vmatpush2.msra.mxu0 0.0
    %342 = vmatprep.subr.mxu0 0.0
    %343 = vmatpush2.msra.mxu0 0.0
    %344 = vmatprep.subr.mxu0 0.0
    %345 = vmatpush2.msra.mxu0 0.0
    %346 = vmatprep.subr.mxu0 0.0
    %347 = vmatpush2.msra.mxu0 0.0
    %348 = vmatprep.subr.mxu0 0.0
    %349 = vmatpush2.msra.mxu0 0.0
    %350 = vmatprep.subr.mxu0 0.0
    %351 = vmatpush2.msra.mxu0 0.0
    %352 = vmatprep.subr.mxu0 0.0
    %353 = vmatpush2.msra.mxu0 0.0
    %354 = vmatprep.subr.mxu0 0.0
    %355 = vmatpush2.msra.mxu0 0.0
    %356 = vmatprep.subr.mxu0 0.0
    %357 = vmatpush2.msra.mxu0 0.0
    %358 = vmatprep.subr.mxu0 0.0
    %359 = vmatpush2.msra.mxu0 0.0
    %360 = vmatprep.mubr.f32.mxu0 0.0
    %v361 = vand.u32 %v247, 4294901760
    %v362 = vsub.f32 %v247, %v361
    %v363 = vand.u32 %v362, 4294901760
    %v364 = vsub.f32 %v362, %v363
    %v365 = vand.u32 %v364, 4294901760
    %366 = vmatmul.mubr.f32.gmra.mxu0 %v365
    %v367 = vpop.f32.mrf.mxu0
    %v368 = vadd.f32 0.0, %v367
    %v369 = vpop.f32.mrf.mxu0
    %370 = vdwg.mxu0
    %371 = vmatprep.subr.mxu0 0.0
    %v372 = vand.u32 %v279, 4294901760
    %v373 = vsub.f32 %v279, %v372
    %v374 = vand.u32 %v373, 4294901760
    %v375 = vsub.f32 %v373, %v374
    %v376 = vand.u32 %v375, 4294901760
    %377 = vmatpush1.msra.mxu0 %v376
    %378 = vmatprep.subr.mxu0 0.0
    %v379 = vand.u32 %v278, 4294901760
    %v380 = vsub.f32 %v278, %v379
    %v381 = vand.u32 %v380, 4294901760
    %v382 = vsub.f32 %v380, %v381
    %v383 = vand.u32 %v382, 4294901760
    %384 = vmatpush1.msra.mxu0 %v383
    %385 = vmatprep.subr.mxu0 0.0
    %v386 = vand.u32 %v277, 4294901760
    %v387 = vsub.f32 %v277, %v386
    %v388 = vand.u32 %v387, 4294901760
    %v389 = vsub.f32 %v387, %v388
    %v390 = vand.u32 %v389, 4294901760
    %391 = vmatpush1.msra.mxu0 %v390
    %392 = vmatprep.subr.mxu0 0.0
    %v393 = vand.u32 %v276, 4294901760
    %v394 = vsub.f32 %v276, %v393
    %v395 = vand.u32 %v394, 4294901760
    %v396 = vsub.f32 %v394, %v395
    %v397 = vand.u32 %v396, 4294901760
    %398 = vmatpush1.msra.mxu0 %v397
    %399 = vmatprep.subr.mxu0 0.0
    %v400 = vand.u32 %v275, 4294901760
    %v401 = vsub.f32 %v275, %v400
    %v402 = vand.u32 %v401, 4294901760
    %v403 = vsub.f32 %v401, %v402
    %v404 = vand.u32 %v403, 4294901760
    %405 = vmatpush1.msra.mxu0 %v404
    %406 = vmatprep.subr.mxu0 0.0
    %v407 = vand.u32 %v274, 4294901760
    %v408 = vsub.f32 %v274, %v407
    %v409 = vand.u32 %v408, 4294901760
    %v410 = vsub.f32 %v408, %v409
    %v411 = vand.u32 %v410, 4294901760
    %412 = vmatpush1.msra.mxu0 %v411
    %413 = vmatprep.subr.mxu0 0.0
    %v414 = vand.u32 %v273, 4294901760
    %v415 = vsub.f32 %v273, %v414
    %v416 = vand.u32 %v415, 4294901760
    %v417 = vsub.f32 %v415, %v416
    %v418 = vand.u32 %v417, 4294901760
    %419 = vmatpush1.msra.mxu0 %v418
    %420 = vmatprep.subr.mxu0 0.0
    %v421 = vand.u32 %v272, 4294901760
    %v422 = vsub.f32 %v272, %v421
    %v423 = vand.u32 %v422, 4294901760
    %v424 = vsub.f32 %v422, %v423
    %v425 = vand.u32 %v424, 4294901760
    %426 = vmatpush1.msra.mxu0 %v425
    %427 = vmatprep.subr.mxu0 0.0
    %v428 = vand.u32 %v271, 4294901760
    %v429 = vsub.f32 %v271, %v428
    %v430 = vand.u32 %v429, 4294901760
    %v431 = vsub.f32 %v429, %v430
    %v432 = vand.u32 %v431, 4294901760
    %433 = vmatpush1.msra.mxu0 %v432
    %434 = vmatprep.subr.mxu0 0.0
    %v435 = vand.u32 %v270, 4294901760
    %v436 = vsub.f32 %v270, %v435
    %v437 = vand.u32 %v436, 4294901760
    %v438 = vsub.f32 %v436, %v437
    %v439 = vand.u32 %v438, 4294901760
    %440 = vmatpush1.msra.mxu0 %v439
    %441 = vmatprep.subr.mxu0 0.0
    %v442 = vand.u32 %v269, 4294901760
    %v443 = vsub.f32 %v269, %v442
    %v444 = vand.u32 %v443, 4294901760
    %v445 = vsub.f32 %v443, %v444
    %v446 = vand.u32 %v445, 4294901760
    %447 = vmatpush1.msra.mxu0 %v446
    %448 = vmatprep.subr.mxu0 0.0
    %v449 = vand.u32 %v268, 4294901760
    %v450 = vsub.f32 %v268, %v449
    %v451 = vand.u32 %v450, 4294901760
    %v452 = vsub.f32 %v450, %v451
    %v453 = vand.u32 %v452, 4294901760
    %454 = vmatpush1.msra.mxu0 %v453
    %455 = vmatprep.subr.mxu0 0.0
    %v456 = vand.u32 %v267, 4294901760
    %v457 = vsub.f32 %v267, %v456
    %v458 = vand.u32 %v457, 4294901760
    %v459 = vsub.f32 %v457, %v458
    %v460 = vand.u32 %v459, 4294901760
    %461 = vmatpush1.msra.mxu0 %v460
    %462 = vmatprep.subr.mxu0 0.0
    %v463 = vand.u32 %v266, 4294901760
    %v464 = vsub.f32 %v266, %v463
    %v465 = vand.u32 %v464, 4294901760
    %v466 = vsub.f32 %v464, %v465
    %v467 = vand.u32 %v466, 4294901760
    %468 = vmatpush1.msra.mxu0 %v467
    %469 = vmatprep.subr.mxu0 0.0
    %v470 = vand.u32 %v265, 4294901760
    %v471 = vsub.f32 %v265, %v470
    %v472 = vand.u32 %v471, 4294901760
    %v473 = vsub.f32 %v471, %v472
    %v474 = vand.u32 %v473, 4294901760
    %475 = vmatpush1.msra.mxu0 %v474
    %476 = vmatprep.subr.mxu0 0.0
    %v477 = vand.u32 %v264, 4294901760
    %v478 = vsub.f32 %v264, %v477
    %v479 = vand.u32 %v478, 4294901760
    %v480 = vsub.f32 %v478, %v479
    %v481 = vand.u32 %v480, 4294901760
    %482 = vmatpush1.msra.mxu0 %v481
    %483 = vmatprep.subr.mxu0 0.0
    %484 = vmatpush2.msra.mxu0 0.0
    %485 = vmatprep.subr.mxu0 0.0
    %486 = vmatpush2.msra.mxu0 0.0
    %487 = vmatprep.subr.mxu0 0.0
    %488 = vmatpush2.msra.mxu0 0.0
    %489 = vmatprep.subr.mxu0 0.0
    %490 = vmatpush2.msra.mxu0 0.0
    %491 = vmatprep.subr.mxu0 0.0
    %492 = vmatpush2.msra.mxu0 0.0
    %493 = vmatprep.subr.mxu0 0.0
    %494 = vmatpush2.msra.mxu0 0.0
    %495 = vmatprep.subr.mxu0 0.0
    %496 = vmatpush2.msra.mxu0 0.0
    %497 = vmatprep.subr.mxu0 0.0
    %498 = vmatpush2.msra.mxu0 0.0
    %499 = vmatprep.subr.mxu0 0.0
    %500 = vmatpush2.msra.mxu0 0.0
    %501 = vmatprep.subr.mxu0 0.0
    %502 = vmatpush2.msra.mxu0 0.0
    %503 = vmatprep.subr.mxu0 0.0
    %504 = vmatpush2.msra.mxu0 0.0
    %505 = vmatprep.subr.mxu0 0.0
    %506 = vmatpush2.msra.mxu0 0.0
    %507 = vmatprep.subr.mxu0 0.0
    %508 = vmatpush2.msra.mxu0 0.0
    %509 = vmatprep.subr.mxu0 0.0
    %510 = vmatpush2.msra.mxu0 0.0
    %511 = vmatprep.subr.mxu0 0.0
    %512 = vmatpush2.msra.mxu0 0.0
    %513 = vmatprep.subr.mxu0 0.0
    %514 = vmatpush2.msra.mxu0 0.0
    %515 = vmatprep.mubr.f32.mxu0 0.0
    %v516 = vand.u32 %v247, 4294901760
    %517 = vmatmul.mubr.f32.gmra.mxu0 %v516
    %v518 = vpop.f32.mrf.mxu0
    %v519 = vadd.f32 %v368, %v518
    %v520 = vpop.f32.mrf.mxu0
    %521 = vdwg.mxu0
    %522 = vmatprep.subr.mxu0 0.0
    %v523 = vand.u32 %v279, 4294901760
    %v524 = vsub.f32 %v279, %v523
    %525 = vmatpush1.msra.mxu0 %v524
    %526 = vmatprep.subr.mxu0 0.0
    %v527 = vand.u32 %v278, 4294901760
    %v528 = vsub.f32 %v278, %v527
    %529 = vmatpush1.msra.mxu0 %v528
    %530 = vmatprep.subr.mxu0 0.0
    %v531 = vand.u32 %v277, 4294901760
    %v532 = vsub.f32 %v277, %v531
    %533 = vmatpush1.msra.mxu0 %v532
    %534 = vmatprep.subr.mxu0 0.0
    %v535 = vand.u32 %v276, 4294901760
    %v536 = vsub.f32 %v276, %v535
    %537 = vmatpush1.msra.mxu0 %v536
    %538 = vmatprep.subr.mxu0 0.0
    %v539 = vand.u32 %v275, 4294901760
    %v540 = vsub.f32 %v275, %v539
    %541 = vmatpush1.msra.mxu0 %v540
    %542 = vmatprep.subr.mxu0 0.0
    %v543 = vand.u32 %v274, 4294901760
    %v544 = vsub.f32 %v274, %v543
    %545 = vmatpush1.msra.mxu0 %v544
    %546 = vmatprep.subr.mxu0 0.0
    %v547 = vand.u32 %v273, 4294901760
    %v548 = vsub.f32 %v273, %v547
    %549 = vmatpush1.msra.mxu0 %v548
    %550 = vmatprep.subr.mxu0 0.0
    %v551 = vand.u32 %v272, 4294901760
    %v552 = vsub.f32 %v272, %v551
    %553 = vmatpush1.msra.mxu0 %v552
    %554 = vmatprep.subr.mxu0 0.0
    %v555 = vand.u32 %v271, 4294901760
    %v556 = vsub.f32 %v271, %v555
    %557 = vmatpush1.msra.mxu0 %v556
    %558 = vmatprep.subr.mxu0 0.0
    %v559 = vand.u32 %v270, 4294901760
    %v560 = vsub.f32 %v270, %v559
    %561 = vmatpush1.msra.mxu0 %v560
    %562 = vmatprep.subr.mxu0 0.0
    %v563 = vand.u32 %v269, 4294901760
    %v564 = vsub.f32 %v269, %v563
    %565 = vmatpush1.msra.mxu0 %v564
    %566 = vmatprep.subr.mxu0 0.0
    %v567 = vand.u32 %v268, 4294901760
    %v568 = vsub.f32 %v268, %v567
    %569 = vmatpush1.msra.mxu0 %v568
    %570 = vmatprep.subr.mxu0 0.0
    %v571 = vand.u32 %v267, 4294901760
    %v572 = vsub.f32 %v267, %v571
    %573 = vmatpush1.msra.mxu0 %v572
    %574 = vmatprep.subr.mxu0 0.0
    %v575 = vand.u32 %v266, 4294901760
    %v576 = vsub.f32 %v266, %v575
    %577 = vmatpush1.msra.mxu0 %v576
    %578 = vmatprep.subr.mxu0 0.0
    %v579 = vand.u32 %v265, 4294901760
    %v580 = vsub.f32 %v265, %v579
    %581 = vmatpush1.msra.mxu0 %v580
    %582 = vmatprep.subr.mxu0 0.0
    %v583 = vand.u32 %v264, 4294901760
    %v584 = vsub.f32 %v264, %v583
    %585 = vmatpush1.msra.mxu0 %v584
    %586 = vmatprep.subr.mxu0 0.0
    %587 = vmatpush2.msra.mxu0 0.0
    %588 = vmatprep.subr.mxu0 0.0
    %589 = vmatpush2.msra.mxu0 0.0
    %590 = vmatprep.subr.mxu0 0.0
    %591 = vmatpush2.msra.mxu0 0.0
    %592 = vmatprep.subr.mxu0 0.0
    %593 = vmatpush2.msra.mxu0 0.0
    %594 = vmatprep.subr.mxu0 0.0
    %595 = vmatpush2.msra.mxu0 0.0
    %596 = vmatprep.subr.mxu0 0.0
    %597 = vmatpush2.msra.mxu0 0.0
    %598 = vmatprep.subr.mxu0 0.0
    %599 = vmatpush2.msra.mxu0 0.0
    %600 = vmatprep.subr.mxu0 0.0
    %601 = vmatpush2.msra.mxu0 0.0
    %602 = vmatprep.subr.mxu0 0.0
    %603 = vmatpush2.msra.mxu0 0.0
    %604 = vmatprep.subr.mxu0 0.0
    %605 = vmatpush2.msra.mxu0 0.0
    %606 = vmatprep.subr.mxu0 0.0
    %607 = vmatpush2.msra.mxu0 0.0
    %608 = vmatprep.subr.mxu0 0.0
    %609 = vmatpush2.msra.mxu0 0.0
    %610 = vmatprep.subr.mxu0 0.0
    %611 = vmatpush2.msra.mxu0 0.0
    %612 = vmatprep.subr.mxu0 0.0
    %613 = vmatpush2.msra.mxu0 0.0
    %614 = vmatprep.subr.mxu0 0.0
    %615 = vmatpush2.msra.mxu0 0.0
    %616 = vmatprep.subr.mxu0 0.0
    %617 = vmatpush2.msra.mxu0 0.0
    %618 = vmatprep.mubr.f32.mxu0 0.0
    %v619 = vand.u32 %v247, 4294901760
    %v620 = vsub.f32 %v247, %v619
    %621 = vmatmul.mubr.f32.gmra.mxu0 %v620
    %v622 = vpop.f32.mrf.mxu0
    %v623 = vadd.f32 %v519, %v622
    %v624 = vpop.f32.mrf.mxu0
    %625 = vdwg.mxu0
    %626 = vmatprep.subr.mxu0 0.0
    %v627 = vand.u32 %v279, 4294901760
    %628 = vmatpush1.msra.mxu0 %v627
    %629 = vmatprep.subr.mxu0 0.0
    %v630 = vand.u32 %v278, 4294901760
    %631 = vmatpush1.msra.mxu0 %v630
    %632 = vmatprep.subr.mxu0 0.0
    %v633 = vand.u32 %v277, 4294901760
    %634 = vmatpush1.msra.mxu0 %v633
    %635 = vmatprep.subr.mxu0 0.0
    %v636 = vand.u32 %v276, 4294901760
    %637 = vmatpush1.msra.mxu0 %v636
    %638 = vmatprep.subr.mxu0 0.0
    %v639 = vand.u32 %v275, 4294901760
    %640 = vmatpush1.msra.mxu0 %v639
    %641 = vmatprep.subr.mxu0 0.0
    %v642 = vand.u32 %v274, 4294901760
    %643 = vmatpush1.msra.mxu0 %v642
    %644 = vmatprep.subr.mxu0 0.0
    %v645 = vand.u32 %v273, 4294901760
    %646 = vmatpush1.msra.mxu0 %v645
    %647 = vmatprep.subr.mxu0 0.0
    %v648 = vand.u32 %v272, 4294901760
    %649 = vmatpush1.msra.mxu0 %v648
    %650 = vmatprep.subr.mxu0 0.0
    %v651 = vand.u32 %v271, 4294901760
    %652 = vmatpush1.msra.mxu0 %v651
    %653 = vmatprep.subr.mxu0 0.0
    %v654 = vand.u32 %v270, 4294901760
    %655 = vmatpush1.msra.mxu0 %v654
    %656 = vmatprep.subr.mxu0 0.0
    %v657 = vand.u32 %v269, 4294901760
    %658 = vmatpush1.msra.mxu0 %v657
    %659 = vmatprep.subr.mxu0 0.0
    %v660 = vand.u32 %v268, 4294901760
    %661 = vmatpush1.msra.mxu0 %v660
    %662 = vmatprep.subr.mxu0 0.0
    %v663 = vand.u32 %v267, 4294901760
    %664 = vmatpush1.msra.mxu0 %v663
    %665 = vmatprep.subr.mxu0 0.0
    %v666 = vand.u32 %v266, 4294901760
    %667 = vmatpush1.msra.mxu0 %v666
    %668 = vmatprep.subr.mxu0 0.0
    %v669 = vand.u32 %v265, 4294901760
    %670 = vmatpush1.msra.mxu0 %v669
    %671 = vmatprep.subr.mxu0 0.0
    %v672 = vand.u32 %v264, 4294901760
    %673 = vmatpush1.msra.mxu0 %v672
    %674 = vmatprep.subr.mxu0 0.0
    %675 = vmatpush2.msra.mxu0 0.0
    %676 = vmatprep.subr.mxu0 0.0
    %677 = vmatpush2.msra.mxu0 0.0
    %678 = vmatprep.subr.mxu0 0.0
    %679 = vmatpush2.msra.mxu0 0.0
    %680 = vmatprep.subr.mxu0 0.0
    %681 = vmatpush2.msra.mxu0 0.0
    %682 = vmatprep.subr.mxu0 0.0
    %683 = vmatpush2.msra.mxu0 0.0
    %684 = vmatprep.subr.mxu0 0.0
    %685 = vmatpush2.msra.mxu0 0.0
    %686 = vmatprep.subr.mxu0 0.0
    %687 = vmatpush2.msra.mxu0 0.0
    %688 = vmatprep.subr.mxu0 0.0
    %689 = vmatpush2.msra.mxu0 0.0
    %690 = vmatprep.subr.mxu0 0.0
    %691 = vmatpush2.msra.mxu0 0.0
    %692 = vmatprep.subr.mxu0 0.0
    %693 = vmatpush2.msra.mxu0 0.0
    %694 = vmatprep.subr.mxu0 0.0
    %695 = vmatpush2.msra.mxu0 0.0
    %696 = vmatprep.subr.mxu0 0.0
    %697 = vmatpush2.msra.mxu0 0.0
    %698 = vmatprep.subr.mxu0 0.0
    %699 = vmatpush2.msra.mxu0 0.0
    %700 = vmatprep.subr.mxu0 0.0
    %701 = vmatpush2.msra.mxu0 0.0
    %702 = vmatprep.subr.mxu0 0.0
    %703 = vmatpush2.msra.mxu0 0.0
    %704 = vmatprep.subr.mxu0 0.0
    %705 = vmatpush2.msra.mxu0 0.0
    %706 = vmatprep.mubr.f32.mxu0 0.0
    %v707 = vand.u32 %v247, 4294901760
    %v708 = vsub.f32 %v247, %v707
    %v709 = vand.u32 %v708, 4294901760
    %710 = vmatmul.mubr.f32.gmra.mxu0 %v709
    %v711 = vpop.f32.mrf.mxu0
    %v712 = vadd.f32 %v623, %v711
    %v713 = vpop.f32.mrf.mxu0
    %714 = vdwg.mxu0
    %715 = vmatprep.subr.mxu0 0.0
    %v716 = vand.u32 %v279, 4294901760
    %v717 = vsub.f32 %v279, %v716
    %v718 = vand.u32 %v717, 4294901760
    %719 = vmatpush1.msra.mxu0 %v718
    %720 = vmatprep.subr.mxu0 0.0
    %v721 = vand.u32 %v278, 4294901760
    %v722 = vsub.f32 %v278, %v721
    %v723 = vand.u32 %v722, 4294901760
    %724 = vmatpush1.msra.mxu0 %v723
    %725 = vmatprep.subr.mxu0 0.0
    %v726 = vand.u32 %v277, 4294901760
    %v727 = vsub.f32 %v277, %v726
    %v728 = vand.u32 %v727, 4294901760
    %729 = vmatpush1.msra.mxu0 %v728
    %730 = vmatprep.subr.mxu0 0.0
    %v731 = vand.u32 %v276, 4294901760
    %v732 = vsub.f32 %v276, %v731
    %v733 = vand.u32 %v732, 4294901760
    %734 = vmatpush1.msra.mxu0 %v733
    %735 = vmatprep.subr.mxu0 0.0
    %v736 = vand.u32 %v275, 4294901760
    %v737 = vsub.f32 %v275, %v736
    %v738 = vand.u32 %v737, 4294901760
    %739 = vmatpush1.msra.mxu0 %v738
    %740 = vmatprep.subr.mxu0 0.0
    %v741 = vand.u32 %v274, 4294901760
    %v742 = vsub.f32 %v274, %v741
    %v743 = vand.u32 %v742, 4294901760
    %744 = vmatpush1.msra.mxu0 %v743
    %745 = vmatprep.subr.mxu0 0.0
    %v746 = vand.u32 %v273, 4294901760
    %v747 = vsub.f32 %v273, %v746
    %v748 = vand.u32 %v747, 4294901760
    %749 = vmatpush1.msra.mxu0 %v748
    %750 = vmatprep.subr.mxu0 0.0
    %v751 = vand.u32 %v272, 4294901760
    %v752 = vsub.f32 %v272, %v751
    %v753 = vand.u32 %v752, 4294901760
    %754 = vmatpush1.msra.mxu0 %v753
    %755 = vmatprep.subr.mxu0 0.0
    %v756 = vand.u32 %v271, 4294901760
    %v757 = vsub.f32 %v271, %v756
    %v758 = vand.u32 %v757, 4294901760
    %759 = vmatpush1.msra.mxu0 %v758
    %760 = vmatprep.subr.mxu0 0.0
    %v761 = vand.u32 %v270, 4294901760
    %v762 = vsub.f32 %v270, %v761
    %v763 = vand.u32 %v762, 4294901760
    %764 = vmatpush1.msra.mxu0 %v763
    %765 = vmatprep.subr.mxu0 0.0
    %v766 = vand.u32 %v269, 4294901760
    %v767 = vsub.f32 %v269, %v766
    %v768 = vand.u32 %v767, 4294901760
    %769 = vmatpush1.msra.mxu0 %v768
    %770 = vmatprep.subr.mxu0 0.0
    %v771 = vand.u32 %v268, 4294901760
    %v772 = vsub.f32 %v268, %v771
    %v773 = vand.u32 %v772, 4294901760
    %774 = vmatpush1.msra.mxu0 %v773
    %775 = vmatprep.subr.mxu0 0.0
    %v776 = vand.u32 %v267, 4294901760
    %v777 = vsub.f32 %v267, %v776
    %v778 = vand.u32 %v777, 4294901760
    %779 = vmatpush1.msra.mxu0 %v778
    %780 = vmatprep.subr.mxu0 0.0
    %v781 = vand.u32 %v266, 4294901760
    %v782 = vsub.f32 %v266, %v781
    %v783 = vand.u32 %v782, 4294901760
    %784 = vmatpush1.msra.mxu0 %v783
    %785 = vmatprep.subr.mxu0 0.0
    %v786 = vand.u32 %v265, 4294901760
    %v787 = vsub.f32 %v265, %v786
    %v788 = vand.u32 %v787, 4294901760
    %789 = vmatpush1.msra.mxu0 %v788
    %790 = vmatprep.subr.mxu0 0.0
    %v791 = vand.u32 %v264, 4294901760
    %v792 = vsub.f32 %v264, %v791
    %v793 = vand.u32 %v792, 4294901760
    %794 = vmatpush1.msra.mxu0 %v793
    %795 = vmatprep.subr.mxu0 0.0
    %796 = vmatpush2.msra.mxu0 0.0
    %797 = vmatprep.subr.mxu0 0.0
    %798 = vmatpush2.msra.mxu0 0.0
    %799 = vmatprep.subr.mxu0 0.0
    %800 = vmatpush2.msra.mxu0 0.0
    %801 = vmatprep.subr.mxu0 0.0
    %802 = vmatpush2.msra.mxu0 0.0
    %803 = vmatprep.subr.mxu0 0.0
    %804 = vmatpush2.msra.mxu0 0.0
    %805 = vmatprep.subr.mxu0 0.0
    %806 = vmatpush2.msra.mxu0 0.0
    %807 = vmatprep.subr.mxu0 0.0
    %808 = vmatpush2.msra.mxu0 0.0
    %809 = vmatprep.subr.mxu0 0.0
    %810 = vmatpush2.msra.mxu0 0.0
    %811 = vmatprep.subr.mxu0 0.0
    %812 = vmatpush2.msra.mxu0 0.0
    %813 = vmatprep.subr.mxu0 0.0
    %814 = vmatpush2.msra.mxu0 0.0
    %815 = vmatprep.subr.mxu0 0.0
    %816 = vmatpush2.msra.mxu0 0.0
    %817 = vmatprep.subr.mxu0 0.0
    %818 = vmatpush2.msra.mxu0 0.0
    %819 = vmatprep.subr.mxu0 0.0
    %820 = vmatpush2.msra.mxu0 0.0
    %821 = vmatprep.subr.mxu0 0.0
    %822 = vmatpush2.msra.mxu0 0.0
    %823 = vmatprep.subr.mxu0 0.0
    %824 = vmatpush2.msra.mxu0 0.0
    %825 = vmatprep.subr.mxu0 0.0
    %826 = vmatpush2.msra.mxu0 0.0
    %827 = vmatprep.mubr.f32.mxu0 0.0
    %v828 = vand.u32 %v247, 4294901760
    %829 = vmatmul.mubr.f32.gmra.mxu0 %v828
    %v830 = vpop.f32.mrf.mxu0
    %v831 = vadd.f32 %v712, %v830
    %v832 = vpop.f32.mrf.mxu0
    %833 = vdwg.mxu0
    %834 = vmatprep.subr.mxu0 0.0
    %v835 = vand.u32 %v279, 4294901760
    %836 = vmatpush1.msra.mxu0 %v835
    %837 = vmatprep.subr.mxu0 0.0
    %v838 = vand.u32 %v278, 4294901760
    %839 = vmatpush1.msra.mxu0 %v838
    %840 = vmatprep.subr.mxu0 0.0
    %v841 = vand.u32 %v277, 4294901760
    %842 = vmatpush1.msra.mxu0 %v841
    %843 = vmatprep.subr.mxu0 0.0
    %v844 = vand.u32 %v276, 4294901760
    %845 = vmatpush1.msra.mxu0 %v844
    %846 = vmatprep.subr.mxu0 0.0
    %v847 = vand.u32 %v275, 4294901760
    %848 = vmatpush1.msra.mxu0 %v847
    %849 = vmatprep.subr.mxu0 0.0
    %v850 = vand.u32 %v274, 4294901760
    %851 = vmatpush1.msra.mxu0 %v850
    %852 = vmatprep.subr.mxu0 0.0
    %v853 = vand.u32 %v273, 4294901760
    %854 = vmatpush1.msra.mxu0 %v853
    %855 = vmatprep.subr.mxu0 0.0
    %v856 = vand.u32 %v272, 4294901760
    %857 = vmatpush1.msra.mxu0 %v856
    %858 = vmatprep.subr.mxu0 0.0
    %v859 = vand.u32 %v271, 4294901760
    %860 = vmatpush1.msra.mxu0 %v859
    %861 = vmatprep.subr.mxu0 0.0
    %v862 = vand.u32 %v270, 4294901760
    %863 = vmatpush1.msra.mxu0 %v862
    %864 = vmatprep.subr.mxu0 0.0
    %v865 = vand.u32 %v269, 4294901760
    %866 = vmatpush1.msra.mxu0 %v865
    %867 = vmatprep.subr.mxu0 0.0
    %v868 = vand.u32 %v268, 4294901760
    %869 = vmatpush1.msra.mxu0 %v868
    %870 = vmatprep.subr.mxu0 0.0
    %v871 = vand.u32 %v267, 4294901760
    %872 = vmatpush1.msra.mxu0 %v871
    %873 = vmatprep.subr.mxu0 0.0
    %v874 = vand.u32 %v266, 4294901760
    %875 = vmatpush1.msra.mxu0 %v874
    %876 = vmatprep.subr.mxu0 0.0
    %v877 = vand.u32 %v265, 4294901760
    %878 = vmatpush1.msra.mxu0 %v877
    %879 = vmatprep.subr.mxu0 0.0
    %v880 = vand.u32 %v264, 4294901760
    %881 = vmatpush1.msra.mxu0 %v880
    %882 = vmatprep.subr.mxu0 0.0
    %883 = vmatpush2.msra.mxu0 0.0
    %884 = vmatprep.subr.mxu0 0.0
    %885 = vmatpush2.msra.mxu0 0.0
    %886 = vmatprep.subr.mxu0 0.0
    %887 = vmatpush2.msra.mxu0 0.0
    %888 = vmatprep.subr.mxu0 0.0
    %889 = vmatpush2.msra.mxu0 0.0
    %890 = vmatprep.subr.mxu0 0.0
    %891 = vmatpush2.msra.mxu0 0.0
    %892 = vmatprep.subr.mxu0 0.0
    %893 = vmatpush2.msra.mxu0 0.0
    %894 = vmatprep.subr.mxu0 0.0
    %895 = vmatpush2.msra.mxu0 0.0
    %896 = vmatprep.subr.mxu0 0.0
    %897 = vmatpush2.msra.mxu0 0.0
    %898 = vmatprep.subr.mxu0 0.0
    %899 = vmatpush2.msra.mxu0 0.0
    %900 = vmatprep.subr.mxu0 0.0
    %901 = vmatpush2.msra.mxu0 0.0
    %902 = vmatprep.subr.mxu0 0.0
    %903 = vmatpush2.msra.mxu0 0.0
    %904 = vmatprep.subr.mxu0 0.0
    %905 = vmatpush2.msra.mxu0 0.0
    %906 = vmatprep.subr.mxu0 0.0
    %907 = vmatpush2.msra.mxu0 0.0
    %908 = vmatprep.subr.mxu0 0.0
    %909 = vmatpush2.msra.mxu0 0.0
    %910 = vmatprep.subr.mxu0 0.0
    %911 = vmatpush2.msra.mxu0 0.0
    %912 = vmatprep.subr.mxu0 0.0
    %913 = vmatpush2.msra.mxu0 0.0
    %914 = vmatprep.mubr.f32.mxu0 0.0
    %v915 = vand.u32 %v247, 4294901760
    %916 = vmatmul.mubr.f32.gmra.mxu0 %v915
    %v917 = vpop.f32.mrf.mxu0
    %v918 = vadd.f32 %v831, %v917
    %v919 = vpop.f32.mrf.mxu0
    %920 = vdwg.mxu0
    %921 = vmatprep.subr.mxu0 0.0
    %v922 = vand.u32 %v263, 4294901760
    %923 = vmatpush1.msra.mxu0 %v922
    %924 = vmatprep.subr.mxu0 0.0
    %v925 = vand.u32 %v262, 4294901760
    %926 = vmatpush1.msra.mxu0 %v925
    %927 = vmatprep.subr.mxu0 0.0
    %v928 = vand.u32 %v261, 4294901760
    %929 = vmatpush1.msra.mxu0 %v928
    %930 = vmatprep.subr.mxu0 0.0
    %v931 = vand.u32 %v260, 4294901760
    %932 = vmatpush1.msra.mxu0 %v931
    %933 = vmatprep.subr.mxu0 0.0
    %v934 = vand.u32 %v259, 4294901760
    %935 = vmatpush1.msra.mxu0 %v934
    %936 = vmatprep.subr.mxu0 0.0
    %v937 = vand.u32 %v258, 4294901760
    %938 = vmatpush1.msra.mxu0 %v937
    %939 = vmatprep.subr.mxu0 0.0
    %v940 = vand.u32 %v257, 4294901760
    %941 = vmatpush1.msra.mxu0 %v940
    %942 = vmatprep.subr.mxu0 0.0
    %v943 = vand.u32 %v256, 4294901760
    %944 = vmatpush1.msra.mxu0 %v943
    %945 = vmatprep.subr.mxu0 0.0
    %v946 = vand.u32 %v255, 4294901760
    %947 = vmatpush1.msra.mxu0 %v946
    %948 = vmatprep.subr.mxu0 0.0
    %v949 = vand.u32 %v254, 4294901760
    %950 = vmatpush1.msra.mxu0 %v949
    %951 = vmatprep.subr.mxu0 0.0
    %v952 = vand.u32 %v253, 4294901760
    %953 = vmatpush1.msra.mxu0 %v952
    %954 = vmatprep.subr.mxu0 0.0
    %v955 = vand.u32 %v252, 4294901760
    %956 = vmatpush1.msra.mxu0 %v955
    %957 = vmatprep.subr.mxu0 0.0
    %v958 = vand.u32 %v251, 4294901760
    %959 = vmatpush1.msra.mxu0 %v958
    %960 = vmatprep.subr.mxu0 0.0
    %v961 = vand.u32 %v250, 4294901760
    %962 = vmatpush1.msra.mxu0 %v961
    %963 = vmatprep.subr.mxu0 0.0
    %v964 = vand.u32 %v249, 4294901760
    %965 = vmatpush1.msra.mxu0 %v964
    %966 = vmatprep.subr.mxu0 0.0
    %v967 = vand.u32 %v248, 4294901760
    %968 = vmatpush1.msra.mxu0 %v967
    %969 = vmatprep.subr.mxu0 0.0
    %970 = vmatpush2.msra.mxu0 0.0
    %971 = vmatprep.subr.mxu0 0.0
    %972 = vmatpush2.msra.mxu0 0.0
    %973 = vmatprep.subr.mxu0 0.0
    %974 = vmatpush2.msra.mxu0 0.0
    %975 = vmatprep.subr.mxu0 0.0
    %976 = vmatpush2.msra.mxu0 0.0
    %977 = vmatprep.subr.mxu0 0.0
    %978 = vmatpush2.msra.mxu0 0.0
    %979 = vmatprep.subr.mxu0 0.0
    %980 = vmatpush2.msra.mxu0 0.0
    %981 = vmatprep.subr.mxu0 0.0
    %982 = vmatpush2.msra.mxu0 0.0
    %983 = vmatprep.subr.mxu0 0.0
    %984 = vmatpush2.msra.mxu0 0.0
    %985 = vmatprep.subr.mxu0 0.0
    %986 = vmatpush2.msra.mxu0 0.0
    %987 = vmatprep.subr.mxu0 0.0
    %988 = vmatpush2.msra.mxu0 0.0
    %989 = vmatprep.subr.mxu0 0.0
    %990 = vmatpush2.msra.mxu0 0.0
    %991 = vmatprep.subr.mxu0 0.0
    %992 = vmatpush2.msra.mxu0 0.0
    %993 = vmatprep.subr.mxu0 0.0
    %994 = vmatpush2.msra.mxu0 0.0
    %995 = vmatprep.subr.mxu0 0.0
    %996 = vmatpush2.msra.mxu0 0.0
    %997 = vmatprep.subr.mxu0 0.0
    %998 = vmatpush2.msra.mxu0 0.0
    %999 = vmatprep.subr.mxu0 0.0
    %1000 = vmatpush2.msra.mxu0 0.0
    %1001 = vmatprep.mubr.f32.mxu0 0.0
    %v1002 = vand.u32 %v143, 4294901760
    %v1003 = vsub.f32 %v143, %v1002
    %v1004 = vand.u32 %v1003, 4294901760
    %v1005 = vsub.f32 %v1003, %v1004
    %v1006 = vand.u32 %v1005, 4294901760
    %1007 = vmatmul.mubr.f32.gmra.mxu0 %v1006
    %v1008 = vpop.f32.mrf.mxu0
    %v1009 = vadd.f32 %v918, %v1008
    %v1010 = vpop.f32.mrf.mxu0
    %1011 = vdwg.mxu0
    %1012 = vmatprep.subr.mxu0 0.0
    %v1013 = vand.u32 %v263, 4294901760
    %v1014 = vsub.f32 %v263, %v1013
    %v1015 = vand.u32 %v1014, 4294901760
    %v1016 = vsub.f32 %v1014, %v1015
    %v1017 = vand.u32 %v1016, 4294901760
    %1018 = vmatpush1.msra.mxu0 %v1017
    %1019 = vmatprep.subr.mxu0 0.0
    %v1020 = vand.u32 %v262, 4294901760
    %v1021 = vsub.f32 %v262, %v1020
    %v1022 = vand.u32 %v1021, 4294901760
    %v1023 = vsub.f32 %v1021, %v1022
    %v1024 = vand.u32 %v1023, 4294901760
    %1025 = vmatpush1.msra.mxu0 %v1024
    %1026 = vmatprep.subr.mxu0 0.0
    %v1027 = vand.u32 %v261, 4294901760
    %v1028 = vsub.f32 %v261, %v1027
    %v1029 = vand.u32 %v1028, 4294901760
    %v1030 = vsub.f32 %v1028, %v1029
    %v1031 = vand.u32 %v1030, 4294901760
    %1032 = vmatpush1.msra.mxu0 %v1031
    %1033 = vmatprep.subr.mxu0 0.0
    %v1034 = vand.u32 %v260, 4294901760
    %v1035 = vsub.f32 %v260, %v1034
    %v1036 = vand.u32 %v1035, 4294901760
    %v1037 = vsub.f32 %v1035, %v1036
    %v1038 = vand.u32 %v1037, 4294901760
    %1039 = vmatpush1.msra.mxu0 %v1038
    %1040 = vmatprep.subr.mxu0 0.0
    %v1041 = vand.u32 %v259, 4294901760
    %v1042 = vsub.f32 %v259, %v1041
    %v1043 = vand.u32 %v1042, 4294901760
    %v1044 = vsub.f32 %v1042, %v1043
    %v1045 = vand.u32 %v1044, 4294901760
    %1046 = vmatpush1.msra.mxu0 %v1045
    %1047 = vmatprep.subr.mxu0 0.0
    %v1048 = vand.u32 %v258, 4294901760
    %v1049 = vsub.f32 %v258, %v1048
    %v1050 = vand.u32 %v1049, 4294901760
    %v1051 = vsub.f32 %v1049, %v1050
    %v1052 = vand.u32 %v1051, 4294901760
    %1053 = vmatpush1.msra.mxu0 %v1052
    %1054 = vmatprep.subr.mxu0 0.0
    %v1055 = vand.u32 %v257, 4294901760
    %v1056 = vsub.f32 %v257, %v1055
    %v1057 = vand.u32 %v1056, 4294901760
    %v1058 = vsub.f32 %v1056, %v1057
    %v1059 = vand.u32 %v1058, 4294901760
    %1060 = vmatpush1.msra.mxu0 %v1059
    %1061 = vmatprep.subr.mxu0 0.0
    %v1062 = vand.u32 %v256, 4294901760
    %v1063 = vsub.f32 %v256, %v1062
    %v1064 = vand.u32 %v1063, 4294901760
    %v1065 = vsub.f32 %v1063, %v1064
    %v1066 = vand.u32 %v1065, 4294901760
    %1067 = vmatpush1.msra.mxu0 %v1066
    %1068 = vmatprep.subr.mxu0 0.0
    %v1069 = vand.u32 %v255, 4294901760
    %v1070 = vsub.f32 %v255, %v1069
    %v1071 = vand.u32 %v1070, 4294901760
    %v1072 = vsub.f32 %v1070, %v1071
    %v1073 = vand.u32 %v1072, 4294901760
    %1074 = vmatpush1.msra.mxu0 %v1073
    %1075 = vmatprep.subr.mxu0 0.0
    %v1076 = vand.u32 %v254, 4294901760
    %v1077 = vsub.f32 %v254, %v1076
    %v1078 = vand.u32 %v1077, 4294901760
    %v1079 = vsub.f32 %v1077, %v1078
    %v1080 = vand.u32 %v1079, 4294901760
    %1081 = vmatpush1.msra.mxu0 %v1080
    %1082 = vmatprep.subr.mxu0 0.0
    %v1083 = vand.u32 %v253, 4294901760
    %v1084 = vsub.f32 %v253, %v1083
    %v1085 = vand.u32 %v1084, 4294901760
    %v1086 = vsub.f32 %v1084, %v1085
    %v1087 = vand.u32 %v1086, 4294901760
    %1088 = vmatpush1.msra.mxu0 %v1087
    %1089 = vmatprep.subr.mxu0 0.0
    %v1090 = vand.u32 %v252, 4294901760
    %v1091 = vsub.f32 %v252, %v1090
    %v1092 = vand.u32 %v1091, 4294901760
    %v1093 = vsub.f32 %v1091, %v1092
    %v1094 = vand.u32 %v1093, 4294901760
    %1095 = vmatpush1.msra.mxu0 %v1094
    %1096 = vmatprep.subr.mxu0 0.0
    %v1097 = vand.u32 %v251, 4294901760
    %v1098 = vsub.f32 %v251, %v1097
    %v1099 = vand.u32 %v1098, 4294901760
    %v1100 = vsub.f32 %v1098, %v1099
    %v1101 = vand.u32 %v1100, 4294901760
    %1102 = vmatpush1.msra.mxu0 %v1101
    %1103 = vmatprep.subr.mxu0 0.0
    %v1104 = vand.u32 %v250, 4294901760
    %v1105 = vsub.f32 %v250, %v1104
    %v1106 = vand.u32 %v1105, 4294901760
    %v1107 = vsub.f32 %v1105, %v1106
    %v1108 = vand.u32 %v1107, 4294901760
    %1109 = vmatpush1.msra.mxu0 %v1108
    %1110 = vmatprep.subr.mxu0 0.0
    %v1111 = vand.u32 %v249, 4294901760
    %v1112 = vsub.f32 %v249, %v1111
    %v1113 = vand.u32 %v1112, 4294901760
    %v1114 = vsub.f32 %v1112, %v1113
    %v1115 = vand.u32 %v1114, 4294901760
    %1116 = vmatpush1.msra.mxu0 %v1115
    %1117 = vmatprep.subr.mxu0 0.0
    %v1118 = vand.u32 %v248, 4294901760
    %v1119 = vsub.f32 %v248, %v1118
    %v1120 = vand.u32 %v1119, 4294901760
    %v1121 = vsub.f32 %v1119, %v1120
    %v1122 = vand.u32 %v1121, 4294901760
    %1123 = vmatpush1.msra.mxu0 %v1122
    %1124 = vmatprep.subr.mxu0 0.0
    %1125 = vmatpush2.msra.mxu0 0.0
    %1126 = vmatprep.subr.mxu0 0.0
    %1127 = vmatpush2.msra.mxu0 0.0
    %1128 = vmatprep.subr.mxu0 0.0
    %1129 = vmatpush2.msra.mxu0 0.0
    %1130 = vmatprep.subr.mxu0 0.0
    %1131 = vmatpush2.msra.mxu0 0.0
    %1132 = vmatprep.subr.mxu0 0.0
    %1133 = vmatpush2.msra.mxu0 0.0
    %1134 = vmatprep.subr.mxu0 0.0
    %1135 = vmatpush2.msra.mxu0 0.0
    %1136 = vmatprep.subr.mxu0 0.0
    %1137 = vmatpush2.msra.mxu0 0.0
    %1138 = vmatprep.subr.mxu0 0.0
    %1139 = vmatpush2.msra.mxu0 0.0
    %1140 = vmatprep.subr.mxu0 0.0
    %1141 = vmatpush2.msra.mxu0 0.0
    %1142 = vmatprep.subr.mxu0 0.0
    %1143 = vmatpush2.msra.mxu0 0.0
    %1144 = vmatprep.subr.mxu0 0.0
    %1145 = vmatpush2.msra.mxu0 0.0
    %1146 = vmatprep.subr.mxu0 0.0
    %1147 = vmatpush2.msra.mxu0 0.0
    %1148 = vmatprep.subr.mxu0 0.0
    %1149 = vmatpush2.msra.mxu0 0.0
    %1150 = vmatprep.subr.mxu0 0.0
    %1151 = vmatpush2.msra.mxu0 0.0
    %1152 = vmatprep.subr.mxu0 0.0
    %1153 = vmatpush2.msra.mxu0 0.0
    %1154 = vmatprep.subr.mxu0 0.0
    %1155 = vmatpush2.msra.mxu0 0.0
    %1156 = vmatprep.mubr.f32.mxu0 0.0
    %v1157 = vand.u32 %v143, 4294901760
    %1158 = vmatmul.mubr.f32.gmra.mxu0 %v1157
    %v1159 = vpop.f32.mrf.mxu0
    %v1160 = vadd.f32 %v1009, %v1159
    %v1161 = vpop.f32.mrf.mxu0
    %1162 = vdwg.mxu0
    %1163 = vmatprep.subr.mxu0 0.0
    %v1164 = vand.u32 %v263, 4294901760
    %v1165 = vsub.f32 %v263, %v1164
    %1166 = vmatpush1.msra.mxu0 %v1165
    %1167 = vmatprep.subr.mxu0 0.0
    %v1168 = vand.u32 %v262, 4294901760
    %v1169 = vsub.f32 %v262, %v1168
    %1170 = vmatpush1.msra.mxu0 %v1169
    %1171 = vmatprep.subr.mxu0 0.0
    %v1172 = vand.u32 %v261, 4294901760
    %v1173 = vsub.f32 %v261, %v1172
    %1174 = vmatpush1.msra.mxu0 %v1173
    %1175 = vmatprep.subr.mxu0 0.0
    %v1176 = vand.u32 %v260, 4294901760
    %v1177 = vsub.f32 %v260, %v1176
    %1178 = vmatpush1.msra.mxu0 %v1177
    %1179 = vmatprep.subr.mxu0 0.0
    %v1180 = vand.u32 %v259, 4294901760
    %v1181 = vsub.f32 %v259, %v1180
    %1182 = vmatpush1.msra.mxu0 %v1181
    %1183 = vmatprep.subr.mxu0 0.0
    %v1184 = vand.u32 %v258, 4294901760
    %v1185 = vsub.f32 %v258, %v1184
    %1186 = vmatpush1.msra.mxu0 %v1185
    %1187 = vmatprep.subr.mxu0 0.0
    %v1188 = vand.u32 %v257, 4294901760
    %v1189 = vsub.f32 %v257, %v1188
    %1190 = vmatpush1.msra.mxu0 %v1189
    %1191 = vmatprep.subr.mxu0 0.0
    %v1192 = vand.u32 %v256, 4294901760
    %v1193 = vsub.f32 %v256, %v1192
    %1194 = vmatpush1.msra.mxu0 %v1193
    %1195 = vmatprep.subr.mxu0 0.0
    %v1196 = vand.u32 %v255, 4294901760
    %v1197 = vsub.f32 %v255, %v1196
    %1198 = vmatpush1.msra.mxu0 %v1197
    %1199 = vmatprep.subr.mxu0 0.0
    %v1200 = vand.u32 %v254, 4294901760
    %v1201 = vsub.f32 %v254, %v1200
    %1202 = vmatpush1.msra.mxu0 %v1201
    %1203 = vmatprep.subr.mxu0 0.0
    %v1204 = vand.u32 %v253, 4294901760
    %v1205 = vsub.f32 %v253, %v1204
    %1206 = vmatpush1.msra.mxu0 %v1205
    %1207 = vmatprep.subr.mxu0 0.0
    %v1208 = vand.u32 %v252, 4294901760
    %v1209 = vsub.f32 %v252, %v1208
    %1210 = vmatpush1.msra.mxu0 %v1209
    %1211 = vmatprep.subr.mxu0 0.0
    %v1212 = vand.u32 %v251, 4294901760
    %v1213 = vsub.f32 %v251, %v1212
    %1214 = vmatpush1.msra.mxu0 %v1213
    %1215 = vmatprep.subr.mxu0 0.0
    %v1216 = vand.u32 %v250, 4294901760
    %v1217 = vsub.f32 %v250, %v1216
    %1218 = vmatpush1.msra.mxu0 %v1217
    %1219 = vmatprep.subr.mxu0 0.0
    %v1220 = vand.u32 %v249, 4294901760
    %v1221 = vsub.f32 %v249, %v1220
    %1222 = vmatpush1.msra.mxu0 %v1221
    %1223 = vmatprep.subr.mxu0 0.0
    %v1224 = vand.u32 %v248, 4294901760
    %v1225 = vsub.f32 %v248, %v1224
    %1226 = vmatpush1.msra.mxu0 %v1225
    %1227 = vmatprep.subr.mxu0 0.0
    %1228 = vmatpush2.msra.mxu0 0.0
    %1229 = vmatprep.subr.mxu0 0.0
    %1230 = vmatpush2.msra.mxu0 0.0
    %1231 = vmatprep.subr.mxu0 0.0
    %1232 = vmatpush2.msra.mxu0 0.0
    %1233 = vmatprep.subr.mxu0 0.0
    %1234 = vmatpush2.msra.mxu0 0.0
    %1235 = vmatprep.subr.mxu0 0.0
    %1236 = vmatpush2.msra.mxu0 0.0
    %1237 = vmatprep.subr.mxu0 0.0
    %1238 = vmatpush2.msra.mxu0 0.0
    %1239 = vmatprep.subr.mxu0 0.0
    %1240 = vmatpush2.msra.mxu0 0.0
    %1241 = vmatprep.subr.mxu0 0.0
    %1242 = vmatpush2.msra.mxu0 0.0
    %1243 = vmatprep.subr.mxu0 0.0
    %1244 = vmatpush2.msra.mxu0 0.0
    %1245 = vmatprep.subr.mxu0 0.0
    %1246 = vmatpush2.msra.mxu0 0.0
    %1247 = vmatprep.subr.mxu0 0.0
    %1248 = vmatpush2.msra.mxu0 0.0
    %1249 = vmatprep.subr.mxu0 0.0
    %1250 = vmatpush2.msra.mxu0 0.0
    %1251 = vmatprep.subr.mxu0 0.0
    %1252 = vmatpush2.msra.mxu0 0.0
    %1253 = vmatprep.subr.mxu0 0.0
    %1254 = vmatpush2.msra.mxu0 0.0
    %1255 = vmatprep.subr.mxu0 0.0
    %1256 = vmatpush2.msra.mxu0 0.0
    %1257 = vmatprep.subr.mxu0 0.0
    %1258 = vmatpush2.msra.mxu0 0.0
    %1259 = vmatprep.mubr.f32.mxu0 0.0
    %v1260 = vand.u32 %v143, 4294901760
    %v1261 = vsub.f32 %v143, %v1260
    %1262 = vmatmul.mubr.f32.gmra.mxu0 %v1261
    %v1263 = vpop.f32.mrf.mxu0
    %v1264 = vadd.f32 %v1160, %v1263
    %v1265 = vpop.f32.mrf.mxu0
    %1266 = vdwg.mxu0
    %1267 = vmatprep.subr.mxu0 0.0
    %v1268 = vand.u32 %v263, 4294901760
    %1269 = vmatpush1.msra.mxu0 %v1268
    %1270 = vmatprep.subr.mxu0 0.0
    %v1271 = vand.u32 %v262, 4294901760
    %1272 = vmatpush1.msra.mxu0 %v1271
    %1273 = vmatprep.subr.mxu0 0.0
    %v1274 = vand.u32 %v261, 4294901760
    %1275 = vmatpush1.msra.mxu0 %v1274
    %1276 = vmatprep.subr.mxu0 0.0
    %v1277 = vand.u32 %v260, 4294901760
    %1278 = vmatpush1.msra.mxu0 %v1277
    %1279 = vmatprep.subr.mxu0 0.0
    %v1280 = vand.u32 %v259, 4294901760
    %1281 = vmatpush1.msra.mxu0 %v1280
    %1282 = vmatprep.subr.mxu0 0.0
    %v1283 = vand.u32 %v258, 4294901760
    %1284 = vmatpush1.msra.mxu0 %v1283
    %1285 = vmatprep.subr.mxu0 0.0
    %v1286 = vand.u32 %v257, 4294901760
    %1287 = vmatpush1.msra.mxu0 %v1286
    %1288 = vmatprep.subr.mxu0 0.0
    %v1289 = vand.u32 %v256, 4294901760
    %1290 = vmatpush1.msra.mxu0 %v1289
    %1291 = vmatprep.subr.mxu0 0.0
    %v1292 = vand.u32 %v255, 4294901760
    %1293 = vmatpush1.msra.mxu0 %v1292
    %1294 = vmatprep.subr.mxu0 0.0
    %v1295 = vand.u32 %v254, 4294901760
    %1296 = vmatpush1.msra.mxu0 %v1295
    %1297 = vmatprep.subr.mxu0 0.0
    %v1298 = vand.u32 %v253, 4294901760
    %1299 = vmatpush1.msra.mxu0 %v1298
    %1300 = vmatprep.subr.mxu0 0.0
    %v1301 = vand.u32 %v252, 4294901760
    %1302 = vmatpush1.msra.mxu0 %v1301
    %1303 = vmatprep.subr.mxu0 0.0
    %v1304 = vand.u32 %v251, 4294901760
    %1305 = vmatpush1.msra.mxu0 %v1304
    %1306 = vmatprep.subr.mxu0 0.0
    %v1307 = vand.u32 %v250, 4294901760
    %1308 = vmatpush1.msra.mxu0 %v1307
    %1309 = vmatprep.subr.mxu0 0.0
    %v1310 = vand.u32 %v249, 4294901760
    %1311 = vmatpush1.msra.mxu0 %v1310
    %1312 = vmatprep.subr.mxu0 0.0
    %v1313 = vand.u32 %v248, 4294901760
    %1314 = vmatpush1.msra.mxu0 %v1313
    %1315 = vmatprep.subr.mxu0 0.0
    %1316 = vmatpush2.msra.mxu0 0.0
    %1317 = vmatprep.subr.mxu0 0.0
    %1318 = vmatpush2.msra.mxu0 0.0
    %1319 = vmatprep.subr.mxu0 0.0
    %1320 = vmatpush2.msra.mxu0 0.0
    %1321 = vmatprep.subr.mxu0 0.0
    %1322 = vmatpush2.msra.mxu0 0.0
    %1323 = vmatprep.subr.mxu0 0.0
    %1324 = vmatpush2.msra.mxu0 0.0
    %1325 = vmatprep.subr.mxu0 0.0
    %1326 = vmatpush2.msra.mxu0 0.0
    %1327 = vmatprep.subr.mxu0 0.0
    %1328 = vmatpush2.msra.mxu0 0.0
    %1329 = vmatprep.subr.mxu0 0.0
    %1330 = vmatpush2.msra.mxu0 0.0
    %1331 = vmatprep.subr.mxu0 0.0
    %1332 = vmatpush2.msra.mxu0 0.0
    %1333 = vmatprep.subr.mxu0 0.0
    %1334 = vmatpush2.msra.mxu0 0.0
    %1335 = vmatprep.subr.mxu0 0.0
    %1336 = vmatpush2.msra.mxu0 0.0
    %1337 = vmatprep.subr.mxu0 0.0
    %1338 = vmatpush2.msra.mxu0 0.0
    %1339 = vmatprep.subr.mxu0 0.0
    %1340 = vmatpush2.msra.mxu0 0.0
    %1341 = vmatprep.subr.mxu0 0.0
    %1342 = vmatpush2.msra.mxu0 0.0
    %1343 = vmatprep.subr.mxu0 0.0
    %1344 = vmatpush2.msra.mxu0 0.0
    %1345 = vmatprep.subr.mxu0 0.0
    %1346 = vmatpush2.msra.mxu0 0.0
    %1347 = vmatprep.mubr.f32.mxu0 0.0
    %v1348 = vand.u32 %v143, 4294901760
    %v1349 = vsub.f32 %v143, %v1348
    %v1350 = vand.u32 %v1349, 4294901760
    %1351 = vmatmul.mubr.f32.gmra.mxu0 %v1350
    %v1352 = vpop.f32.mrf.mxu0
    %v1353 = vadd.f32 %v1264, %v1352
    %v1354 = vpop.f32.mrf.mxu0
    %1355 = vdwg.mxu0
    %1356 = vmatprep.subr.mxu0 0.0
    %v1357 = vand.u32 %v263, 4294901760
    %v1358 = vsub.f32 %v263, %v1357
    %v1359 = vand.u32 %v1358, 4294901760
    %1360 = vmatpush1.msra.mxu0 %v1359
    %1361 = vmatprep.subr.mxu0 0.0
    %v1362 = vand.u32 %v262, 4294901760
    %v1363 = vsub.f32 %v262, %v1362
    %v1364 = vand.u32 %v1363, 4294901760
    %1365 = vmatpush1.msra.mxu0 %v1364
    %1366 = vmatprep.subr.mxu0 0.0
    %v1367 = vand.u32 %v261, 4294901760
    %v1368 = vsub.f32 %v261, %v1367
    %v1369 = vand.u32 %v1368, 4294901760
    %1370 = vmatpush1.msra.mxu0 %v1369
    %1371 = vmatprep.subr.mxu0 0.0
    %v1372 = vand.u32 %v260, 4294901760
    %v1373 = vsub.f32 %v260, %v1372
    %v1374 = vand.u32 %v1373, 4294901760
    %1375 = vmatpush1.msra.mxu0 %v1374
    %1376 = vmatprep.subr.mxu0 0.0
    %v1377 = vand.u32 %v259, 4294901760
    %v1378 = vsub.f32 %v259, %v1377
    %v1379 = vand.u32 %v1378, 4294901760
    %1380 = vmatpush1.msra.mxu0 %v1379
    %1381 = vmatprep.subr.mxu0 0.0
    %v1382 = vand.u32 %v258, 4294901760
    %v1383 = vsub.f32 %v258, %v1382
    %v1384 = vand.u32 %v1383, 4294901760
    %1385 = vmatpush1.msra.mxu0 %v1384
    %1386 = vmatprep.subr.mxu0 0.0
    %v1387 = vand.u32 %v257, 4294901760
    %v1388 = vsub.f32 %v257, %v1387
    %v1389 = vand.u32 %v1388, 4294901760
    %1390 = vmatpush1.msra.mxu0 %v1389
    %1391 = vmatprep.subr.mxu0 0.0
    %v1392 = vand.u32 %v256, 4294901760
    %v1393 = vsub.f32 %v256, %v1392
    %v1394 = vand.u32 %v1393, 4294901760
    %1395 = vmatpush1.msra.mxu0 %v1394
    %1396 = vmatprep.subr.mxu0 0.0
    %v1397 = vand.u32 %v255, 4294901760
    %v1398 = vsub.f32 %v255, %v1397
    %v1399 = vand.u32 %v1398, 4294901760
    %1400 = vmatpush1.msra.mxu0 %v1399
    %1401 = vmatprep.subr.mxu0 0.0
    %v1402 = vand.u32 %v254, 4294901760
    %v1403 = vsub.f32 %v254, %v1402
    %v1404 = vand.u32 %v1403, 4294901760
    %1405 = vmatpush1.msra.mxu0 %v1404
    %1406 = vmatprep.subr.mxu0 0.0
    %v1407 = vand.u32 %v253, 4294901760
    %v1408 = vsub.f32 %v253, %v1407
    %v1409 = vand.u32 %v1408, 4294901760
    %1410 = vmatpush1.msra.mxu0 %v1409
    %1411 = vmatprep.subr.mxu0 0.0
    %v1412 = vand.u32 %v252, 4294901760
    %v1413 = vsub.f32 %v252, %v1412
    %v1414 = vand.u32 %v1413, 4294901760
    %1415 = vmatpush1.msra.mxu0 %v1414
    %1416 = vmatprep.subr.mxu0 0.0
    %v1417 = vand.u32 %v251, 4294901760
    %v1418 = vsub.f32 %v251, %v1417
    %v1419 = vand.u32 %v1418, 4294901760
    %1420 = vmatpush1.msra.mxu0 %v1419
    %1421 = vmatprep.subr.mxu0 0.0
    %v1422 = vand.u32 %v250, 4294901760
    %v1423 = vsub.f32 %v250, %v1422
    %v1424 = vand.u32 %v1423, 4294901760
    %1425 = vmatpush1.msra.mxu0 %v1424
    %1426 = vmatprep.subr.mxu0 0.0
    %v1427 = vand.u32 %v249, 4294901760
    %v1428 = vsub.f32 %v249, %v1427
    %v1429 = vand.u32 %v1428, 4294901760
    %1430 = vmatpush1.msra.mxu0 %v1429
    %1431 = vmatprep.subr.mxu0 0.0
    %v1432 = vand.u32 %v248, 4294901760
    %v1433 = vsub.f32 %v248, %v1432
    %v1434 = vand.u32 %v1433, 4294901760
    %1435 = vmatpush1.msra.mxu0 %v1434
    %1436 = vmatprep.subr.mxu0 0.0
    %1437 = vmatpush2.msra.mxu0 0.0
    %1438 = vmatprep.subr.mxu0 0.0
    %1439 = vmatpush2.msra.mxu0 0.0
    %1440 = vmatprep.subr.mxu0 0.0
    %1441 = vmatpush2.msra.mxu0 0.0
    %1442 = vmatprep.subr.mxu0 0.0
    %1443 = vmatpush2.msra.mxu0 0.0
    %1444 = vmatprep.subr.mxu0 0.0
    %1445 = vmatpush2.msra.mxu0 0.0
    %1446 = vmatprep.subr.mxu0 0.0
    %1447 = vmatpush2.msra.mxu0 0.0
    %1448 = vmatprep.subr.mxu0 0.0
    %1449 = vmatpush2.msra.mxu0 0.0
    %1450 = vmatprep.subr.mxu0 0.0
    %1451 = vmatpush2.msra.mxu0 0.0
    %1452 = vmatprep.subr.mxu0 0.0
    %1453 = vmatpush2.msra.mxu0 0.0
    %1454 = vmatprep.subr.mxu0 0.0
    %1455 = vmatpush2.msra.mxu0 0.0
    %1456 = vmatprep.subr.mxu0 0.0
    %1457 = vmatpush2.msra.mxu0 0.0
    %1458 = vmatprep.subr.mxu0 0.0
    %1459 = vmatpush2.msra.mxu0 0.0
    %1460 = vmatprep.subr.mxu0 0.0
    %1461 = vmatpush2.msra.mxu0 0.0
    %1462 = vmatprep.subr.mxu0 0.0
    %1463 = vmatpush2.msra.mxu0 0.0
    %1464 = vmatprep.subr.mxu0 0.0
    %1465 = vmatpush2.msra.mxu0 0.0
    %1466 = vmatprep.subr.mxu0 0.0
    %1467 = vmatpush2.msra.mxu0 0.0
    %1468 = vmatprep.mubr.f32.mxu0 0.0
    %v1469 = vand.u32 %v143, 4294901760
    %1470 = vmatmul.mubr.f32.gmra.mxu0 %v1469
    %v1471 = vpop.f32.mrf.mxu0
    %v1472 = vadd.f32 %v1353, %v1471
    %v1473 = vpop.f32.mrf.mxu0
    %1474 = vdwg.mxu0
    %1475 = vmatprep.subr.mxu0 0.0
    %v1476 = vand.u32 %v263, 4294901760
    %1477 = vmatpush1.msra.mxu0 %v1476
    %1478 = vmatprep.subr.mxu0 0.0
    %v1479 = vand.u32 %v262, 4294901760
    %1480 = vmatpush1.msra.mxu0 %v1479
    %1481 = vmatprep.subr.mxu0 0.0
    %v1482 = vand.u32 %v261, 4294901760
    %1483 = vmatpush1.msra.mxu0 %v1482
    %1484 = vmatprep.subr.mxu0 0.0
    %v1485 = vand.u32 %v260, 4294901760
    %1486 = vmatpush1.msra.mxu0 %v1485
    %1487 = vmatprep.subr.mxu0 0.0
    %v1488 = vand.u32 %v259, 4294901760
    %1489 = vmatpush1.msra.mxu0 %v1488
    %1490 = vmatprep.subr.mxu0 0.0
    %v1491 = vand.u32 %v258, 4294901760
    %1492 = vmatpush1.msra.mxu0 %v1491
    %1493 = vmatprep.subr.mxu0 0.0
    %v1494 = vand.u32 %v257, 4294901760
    %1495 = vmatpush1.msra.mxu0 %v1494
    %1496 = vmatprep.subr.mxu0 0.0
    %v1497 = vand.u32 %v256, 4294901760
    %1498 = vmatpush1.msra.mxu0 %v1497
    %1499 = vmatprep.subr.mxu0 0.0
    %v1500 = vand.u32 %v255, 4294901760
    %1501 = vmatpush1.msra.mxu0 %v1500
    %1502 = vmatprep.subr.mxu0 0.0
    %v1503 = vand.u32 %v254, 4294901760
    %1504 = vmatpush1.msra.mxu0 %v1503
    %1505 = vmatprep.subr.mxu0 0.0
    %v1506 = vand.u32 %v253, 4294901760
    %1507 = vmatpush1.msra.mxu0 %v1506
    %1508 = vmatprep.subr.mxu0 0.0
    %v1509 = vand.u32 %v252, 4294901760
    %1510 = vmatpush1.msra.mxu0 %v1509
    %1511 = vmatprep.subr.mxu0 0.0
    %v1512 = vand.u32 %v251, 4294901760
    %1513 = vmatpush1.msra.mxu0 %v1512
    %1514 = vmatprep.subr.mxu0 0.0
    %v1515 = vand.u32 %v250, 4294901760
    %1516 = vmatpush1.msra.mxu0 %v1515
    %1517 = vmatprep.subr.mxu0 0.0
    %v1518 = vand.u32 %v249, 4294901760
    %1519 = vmatpush1.msra.mxu0 %v1518
    %1520 = vmatprep.subr.mxu0 0.0
    %v1521 = vand.u32 %v248, 4294901760
    %1522 = vmatpush1.msra.mxu0 %v1521
    %1523 = vmatprep.subr.mxu0 0.0
    %1524 = vmatpush2.msra.mxu0 0.0
    %1525 = vmatprep.subr.mxu0 0.0
    %1526 = vmatpush2.msra.mxu0 0.0
    %1527 = vmatprep.subr.mxu0 0.0
    %1528 = vmatpush2.msra.mxu0 0.0
    %1529 = vmatprep.subr.mxu0 0.0
    %1530 = vmatpush2.msra.mxu0 0.0
    %1531 = vmatprep.subr.mxu0 0.0
    %1532 = vmatpush2.msra.mxu0 0.0
    %1533 = vmatprep.subr.mxu0 0.0
    %1534 = vmatpush2.msra.mxu0 0.0
    %1535 = vmatprep.subr.mxu0 0.0
    %1536 = vmatpush2.msra.mxu0 0.0
    %1537 = vmatprep.subr.mxu0 0.0
    %1538 = vmatpush2.msra.mxu0 0.0
    %1539 = vmatprep.subr.mxu0 0.0
    %1540 = vmatpush2.msra.mxu0 0.0
    %1541 = vmatprep.subr.mxu0 0.0
    %1542 = vmatpush2.msra.mxu0 0.0
    %1543 = vmatprep.subr.mxu0 0.0
    %1544 = vmatpush2.msra.mxu0 0.0
    %1545 = vmatprep.subr.mxu0 0.0
    %1546 = vmatpush2.msra.mxu0 0.0
    %1547 = vmatprep.subr.mxu0 0.0
    %1548 = vmatpush2.msra.mxu0 0.0
    %1549 = vmatprep.subr.mxu0 0.0
    %1550 = vmatpush2.msra.mxu0 0.0
    %1551 = vmatprep.subr.mxu0 0.0
    %1552 = vmatpush2.msra.mxu0 0.0
    %1553 = vmatprep.subr.mxu0 0.0
    %1554 = vmatpush2.msra.mxu0 0.0
    %1555 = vmatprep.mubr.f32.mxu0 0.0
    %v1556 = vand.u32 %v143, 4294901760
    %1557 = vmatmul.mubr.f32.gmra.mxu0 %v1556
    %v1558 = vpop.f32.mrf.mxu0
    %v1559 = vadd.f32 %v1472, %v1558
    %v1560 = vpop.f32.mrf.mxu0
    %1561 = vdwg.mxu0
    %v1562 = vld [vmem:[%s4] sm:$0x1]
    %v1564 = vlaneseq
    %v1565 = vshrl.u32 %v1564, 7
    %v1566 = vsub.s32 0, %v1565
    %v1567 = vrot.slane %v1562, %v1566
    %v1569 = vadd.f32 %v1559, %v1567
    %v1570 = vxor.u32 %v1569, 2147483648
    %v1571 = vmul.f32 %v1570, 1.442695
    %v1572 = vpow.pop %v1571
    %v1573 = vadd.f32 %v1572, 1.0
    %v1574 = vrcp.pop %v1573
    %v1575 = vmul.f32 1.0, %v1574
    %v1576 = vmul.f32 %v1569, %v1575
    %v1577 = vld [vmem:[%s5] sm:$0xff]
    %v1578 = vld [vmem:[%s5 + $0x8] sm:$0xff]
    %v1579 = vld [vmem:[%s5 + $0x10] sm:$0xff]
    %v1580 = vld [vmem:[%s5 + $0x18] sm:$0xff]
    %v1581 = vld [vmem:[%s6] sm:$0x1]
    %v1583 = vlaneseq
    %v1584 = vshrl.u32 %v1583, 7
    %v1585 = vsub.s32 0, %v1584
    %v1586 = vrot.slane %v1581, %v1585
    %vm1588 = vcmask 261120
    %v1590 = vsel %vm1588, %v1576, 0
    %1592 = vmatprep.subr.mxu0 0.0
    %1593 = vmatpush1.msra.mxu0 0.0
    %1594 = vmatprep.subr.mxu0 0.0
    %1595 = vmatpush1.msra.mxu0 0.0
    %1596 = vmatprep.subr.mxu0 0.0
    %1597 = vmatpush1.msra.mxu0 0.0
    %1598 = vmatprep.subr.mxu0 0.0
    %1599 = vmatpush1.msra.mxu0 0.0
    %1600 = vmatprep.subr.mxu0 0.0
    %1601 = vmatpush1.msra.mxu0 0.0
    %1602 = vmatprep.subr.mxu0 0.0
    %1603 = vmatpush1.msra.mxu0 0.0
    %1604 = vmatprep.subr.mxu0 0.0
    %1605 = vmatpush1.msra.mxu0 0.0
    %1606 = vmatprep.subr.mxu0 0.0
    %1607 = vmatpush1.msra.mxu0 0.0
    %1608 = vmatprep.subr.mxu0 0.0
    %1609 = vmatpush1.msra.mxu0 0.0
    %1610 = vmatprep.subr.mxu0 0.0
    %1611 = vmatpush1.msra.mxu0 0.0
    %1612 = vmatprep.subr.mxu0 0.0
    %1613 = vmatpush1.msra.mxu0 0.0
    %1614 = vmatprep.subr.mxu0 0.0
    %1615 = vmatpush1.msra.mxu0 0.0
    %1616 = vmatprep.subr.mxu0 0.0
    %v1617 = vand.u32 %v1580, 4294901760
    %1618 = vmatpush1.msra.mxu0 %v1617
    %1619 = vmatprep.subr.mxu0 0.0
    %v1620 = vand.u32 %v1579, 4294901760
    %1621 = vmatpush1.msra.mxu0 %v1620
    %1622 = vmatprep.subr.mxu0 0.0
    %v1623 = vand.u32 %v1578, 4294901760
    %1624 = vmatpush1.msra.mxu0 %v1623
    %1625 = vmatprep.subr.mxu0 0.0
    %v1626 = vand.u32 %v1577, 4294901760
    %1627 = vmatpush1.msra.mxu0 %v1626
    %1628 = vmatprep.subr.mxu0 0.0
    %1629 = vmatpush2.msra.mxu0 0.0
    %1630 = vmatprep.subr.mxu0 0.0
    %1631 = vmatpush2.msra.mxu0 0.0
    %1632 = vmatprep.subr.mxu0 0.0
    %1633 = vmatpush2.msra.mxu0 0.0
    %1634 = vmatprep.subr.mxu0 0.0
    %1635 = vmatpush2.msra.mxu0 0.0
    %1636 = vmatprep.subr.mxu0 0.0
    %1637 = vmatpush2.msra.mxu0 0.0
    %1638 = vmatprep.subr.mxu0 0.0
    %1639 = vmatpush2.msra.mxu0 0.0
    %1640 = vmatprep.subr.mxu0 0.0
    %1641 = vmatpush2.msra.mxu0 0.0
    %1642 = vmatprep.subr.mxu0 0.0
    %1643 = vmatpush2.msra.mxu0 0.0
    %1644 = vmatprep.subr.mxu0 0.0
    %1645 = vmatpush2.msra.mxu0 0.0
    %1646 = vmatprep.subr.mxu0 0.0
    %1647 = vmatpush2.msra.mxu0 0.0
    %1648 = vmatprep.subr.mxu0 0.0
    %1649 = vmatpush2.msra.mxu0 0.0
    %1650 = vmatprep.subr.mxu0 0.0
    %1651 = vmatpush2.msra.mxu0 0.0
    %1652 = vmatprep.subr.mxu0 0.0
    %1653 = vmatpush2.msra.mxu0 0.0
    %1654 = vmatprep.subr.mxu0 0.0
    %1655 = vmatpush2.msra.mxu0 0.0
    %1656 = vmatprep.subr.mxu0 0.0
    %1657 = vmatpush2.msra.mxu0 0.0
    %1658 = vmatprep.subr.mxu0 0.0
    %1659 = vmatpush2.msra.mxu0 0.0
    %1660 = vmatprep.mubr.f32.mxu0 0.0
    %v1661 = vand.u32 %v1590, 4294901760
    %v1662 = vsub.f32 %v1590, %v1661
    %v1663 = vand.u32 %v1662, 4294901760
    %v1664 = vsub.f32 %v1662, %v1663
    %v1665 = vand.u32 %v1664, 4294901760
    %1666 = vmatmul.mubr.f32.gmra.mxu0 %v1665
    %v1667 = vpop.f32.mrf.mxu0
    %v1668 = vadd.f32 %v1586, %v1667
    %v1669 = vpop.f32.mrf.mxu0
    %1670 = vdwg.mxu0
    %1671 = vmatprep.subr.mxu0 0.0
    %1672 = vmatpush1.msra.mxu0 0.0
    %1673 = vmatprep.subr.mxu0 0.0
    %1674 = vmatpush1.msra.mxu0 0.0
    %1675 = vmatprep.subr.mxu0 0.0
    %1676 = vmatpush1.msra.mxu0 0.0
    %1677 = vmatprep.subr.mxu0 0.0
    %1678 = vmatpush1.msra.mxu0 0.0
    %1679 = vmatprep.subr.mxu0 0.0
    %1680 = vmatpush1.msra.mxu0 0.0
    %1681 = vmatprep.subr.mxu0 0.0
    %1682 = vmatpush1.msra.mxu0 0.0
    %1683 = vmatprep.subr.mxu0 0.0
    %1684 = vmatpush1.msra.mxu0 0.0
    %1685 = vmatprep.subr.mxu0 0.0
    %1686 = vmatpush1.msra.mxu0 0.0
    %1687 = vmatprep.subr.mxu0 0.0
    %1688 = vmatpush1.msra.mxu0 0.0
    %1689 = vmatprep.subr.mxu0 0.0
    %1690 = vmatpush1.msra.mxu0 0.0
    %1691 = vmatprep.subr.mxu0 0.0
    %1692 = vmatpush1.msra.mxu0 0.0
    %1693 = vmatprep.subr.mxu0 0.0
    %1694 = vmatpush1.msra.mxu0 0.0
    %1695 = vmatprep.subr.mxu0 0.0
    %v1696 = vand.u32 %v1580, 4294901760
    %v1697 = vsub.f32 %v1580, %v1696
    %v1698 = vand.u32 %v1697, 4294901760
    %v1699 = vsub.f32 %v1697, %v1698
    %v1700 = vand.u32 %v1699, 4294901760
    %1701 = vmatpush1.msra.mxu0 %v1700
    %1702 = vmatprep.subr.mxu0 0.0
    %v1703 = vand.u32 %v1579, 4294901760
    %v1704 = vsub.f32 %v1579, %v1703
    %v1705 = vand.u32 %v1704, 4294901760
    %v1706 = vsub.f32 %v1704, %v1705
    %v1707 = vand.u32 %v1706, 4294901760
    %1708 = vmatpush1.msra.mxu0 %v1707
    %1709 = vmatprep.subr.mxu0 0.0
    %v1710 = vand.u32 %v1578, 4294901760
    %v1711 = vsub.f32 %v1578, %v1710
    %v1712 = vand.u32 %v1711, 4294901760
    %v1713 = vsub.f32 %v1711, %v1712
    %v1714 = vand.u32 %v1713, 4294901760
    %1715 = vmatpush1.msra.mxu0 %v1714
    %1716 = vmatprep.subr.mxu0 0.0
    %v1717 = vand.u32 %v1577, 4294901760
    %v1718 = vsub.f32 %v1577, %v1717
    %v1719 = vand.u32 %v1718, 4294901760
    %v1720 = vsub.f32 %v1718, %v1719
    %v1721 = vand.u32 %v1720, 4294901760
    %1722 = vmatpush1.msra.mxu0 %v1721
    %1723 = vmatprep.subr.mxu0 0.0
    %1724 = vmatpush2.msra.mxu0 0.0
    %1725 = vmatprep.subr.mxu0 0.0
    %1726 = vmatpush2.msra.mxu0 0.0
    %1727 = vmatprep.subr.mxu0 0.0
    %1728 = vmatpush2.msra.mxu0 0.0
    %1729 = vmatprep.subr.mxu0 0.0
    %1730 = vmatpush2.msra.mxu0 0.0
    %1731 = vmatprep.subr.mxu0 0.0
    %1732 = vmatpush2.msra.mxu0 0.0
    %1733 = vmatprep.subr.mxu0 0.0
    %1734 = vmatpush2.msra.mxu0 0.0
    %1735 = vmatprep.subr.mxu0 0.0
    %1736 = vmatpush2.msra.mxu0 0.0
    %1737 = vmatprep.subr.mxu0 0.0
    %1738 = vmatpush2.msra.mxu0 0.0
    %1739 = vmatprep.subr.mxu0 0.0
    %1740 = vmatpush2.msra.mxu0 0.0
    %1741 = vmatprep.subr.mxu0 0.0
    %1742 = vmatpush2.msra.mxu0 0.0
    %1743 = vmatprep.subr.mxu0 0.0
    %1744 = vmatpush2.msra.mxu0 0.0
    %1745 = vmatprep.subr.mxu0 0.0
    %1746 = vmatpush2.msra.mxu0 0.0
    %1747 = vmatprep.subr.mxu0 0.0
    %1748 = vmatpush2.msra.mxu0 0.0
    %1749 = vmatprep.subr.mxu0 0.0
    %1750 = vmatpush2.msra.mxu0 0.0
    %1751 = vmatprep.subr.mxu0 0.0
    %1752 = vmatpush2.msra.mxu0 0.0
    %1753 = vmatprep.subr.mxu0 0.0
    %1754 = vmatpush2.msra.mxu0 0.0
    %1755 = vmatprep.mubr.f32.mxu0 0.0
    %v1756 = vand.u32 %v1590, 4294901760
    %1757 = vmatmul.mubr.f32.gmra.mxu0 %v1756
    %v1758 = vpop.f32.mrf.mxu0
    %v1759 = vadd.f32 %v1668, %v1758
    %v1760 = vpop.f32.mrf.mxu0
    %1761 = vdwg.mxu0
    %1762 = vmatprep.subr.mxu0 0.0
    %1763 = vmatpush1.msra.mxu0 0.0
    %1764 = vmatprep.subr.mxu0 0.0
    %1765 = vmatpush1.msra.mxu0 0.0
    %1766 = vmatprep.subr.mxu0 0.0
    %1767 = vmatpush1.msra.mxu0 0.0
    %1768 = vmatprep.subr.mxu0 0.0
    %1769 = vmatpush1.msra.mxu0 0.0
    %1770 = vmatprep.subr.mxu0 0.0
    %1771 = vmatpush1.msra.mxu0 0.0
    %1772 = vmatprep.subr.mxu0 0.0
    %1773 = vmatpush1.msra.mxu0 0.0
    %1774 = vmatprep.subr.mxu0 0.0
    %1775 = vmatpush1.msra.mxu0 0.0
    %1776 = vmatprep.subr.mxu0 0.0
    %1777 = vmatpush1.msra.mxu0 0.0
    %1778 = vmatprep.subr.mxu0 0.0
    %1779 = vmatpush1.msra.mxu0 0.0
    %1780 = vmatprep.subr.mxu0 0.0
    %1781 = vmatpush1.msra.mxu0 0.0
    %1782 = vmatprep.subr.mxu0 0.0
    %1783 = vmatpush1.msra.mxu0 0.0
    %1784 = vmatprep.subr.mxu0 0.0
    %1785 = vmatpush1.msra.mxu0 0.0
    %1786 = vmatprep.subr.mxu0 0.0
    %v1787 = vand.u32 %v1580, 4294901760
    %v1788 = vsub.f32 %v1580, %v1787
    %1789 = vmatpush1.msra.mxu0 %v1788
    %1790 = vmatprep.subr.mxu0 0.0
    %v1791 = vand.u32 %v1579, 4294901760
    %v1792 = vsub.f32 %v1579, %v1791
    %1793 = vmatpush1.msra.mxu0 %v1792
    %1794 = vmatprep.subr.mxu0 0.0
    %v1795 = vand.u32 %v1578, 4294901760
    %v1796 = vsub.f32 %v1578, %v1795
    %1797 = vmatpush1.msra.mxu0 %v1796
    %1798 = vmatprep.subr.mxu0 0.0
    %v1799 = vand.u32 %v1577, 4294901760
    %v1800 = vsub.f32 %v1577, %v1799
    %1801 = vmatpush1.msra.mxu0 %v1800
    %1802 = vmatprep.subr.mxu0 0.0
    %1803 = vmatpush2.msra.mxu0 0.0
    %1804 = vmatprep.subr.mxu0 0.0
    %1805 = vmatpush2.msra.mxu0 0.0
    %1806 = vmatprep.subr.mxu0 0.0
    %1807 = vmatpush2.msra.mxu0 0.0
    %1808 = vmatprep.subr.mxu0 0.0
    %1809 = vmatpush2.msra.mxu0 0.0
    %1810 = vmatprep.subr.mxu0 0.0
    %1811 = vmatpush2.msra.mxu0 0.0
    %1812 = vmatprep.subr.mxu0 0.0
    %1813 = vmatpush2.msra.mxu0 0.0
    %1814 = vmatprep.subr.mxu0 0.0
    %1815 = vmatpush2.msra.mxu0 0.0
    %1816 = vmatprep.subr.mxu0 0.0
    %1817 = vmatpush2.msra.mxu0 0.0
    %1818 = vmatprep.subr.mxu0 0.0
    %1819 = vmatpush2.msra.mxu0 0.0
    %1820 = vmatprep.subr.mxu0 0.0
    %1821 = vmatpush2.msra.mxu0 0.0
    %1822 = vmatprep.subr.mxu0 0.0
    %1823 = vmatpush2.msra.mxu0 0.0
    %1824 = vmatprep.subr.mxu0 0.0
    %1825 = vmatpush2.msra.mxu0 0.0
    %1826 = vmatprep.subr.mxu0 0.0
    %1827 = vmatpush2.msra.mxu0 0.0
    %1828 = vmatprep.subr.mxu0 0.0
    %1829 = vmatpush2.msra.mxu0 0.0
    %1830 = vmatprep.subr.mxu0 0.0
    %1831 = vmatpush2.msra.mxu0 0.0
    %1832 = vmatprep.subr.mxu0 0.0
    %1833 = vmatpush2.msra.mxu0 0.0
    %1834 = vmatprep.mubr.f32.mxu0 0.0
    %v1835 = vand.u32 %v1590, 4294901760
    %v1836 = vsub.f32 %v1590, %v1835
    %1837 = vmatmul.mubr.f32.gmra.mxu0 %v1836
    %v1838 = vpop.f32.mrf.mxu0
    %v1839 = vadd.f32 %v1759, %v1838
    %v1840 = vpop.f32.mrf.mxu0
    %1841 = vdwg.mxu0
    %1842 = vmatprep.subr.mxu0 0.0
    %1843 = vmatpush1.msra.mxu0 0.0
    %1844 = vmatprep.subr.mxu0 0.0
    %1845 = vmatpush1.msra.mxu0 0.0
    %1846 = vmatprep.subr.mxu0 0.0
    %1847 = vmatpush1.msra.mxu0 0.0
    %1848 = vmatprep.subr.mxu0 0.0
    %1849 = vmatpush1.msra.mxu0 0.0
    %1850 = vmatprep.subr.mxu0 0.0
    %1851 = vmatpush1.msra.mxu0 0.0
    %1852 = vmatprep.subr.mxu0 0.0
    %1853 = vmatpush1.msra.mxu0 0.0
    %1854 = vmatprep.subr.mxu0 0.0
    %1855 = vmatpush1.msra.mxu0 0.0
    %1856 = vmatprep.subr.mxu0 0.0
    %1857 = vmatpush1.msra.mxu0 0.0
    %1858 = vmatprep.subr.mxu0 0.0
    %1859 = vmatpush1.msra.mxu0 0.0
    %1860 = vmatprep.subr.mxu0 0.0
    %1861 = vmatpush1.msra.mxu0 0.0
    %1862 = vmatprep.subr.mxu0 0.0
    %1863 = vmatpush1.msra.mxu0 0.0
    %1864 = vmatprep.subr.mxu0 0.0
    %1865 = vmatpush1.msra.mxu0 0.0
    %1866 = vmatprep.subr.mxu0 0.0
    %v1867 = vand.u32 %v1580, 4294901760
    %1868 = vmatpush1.msra.mxu0 %v1867
    %1869 = vmatprep.subr.mxu0 0.0
    %v1870 = vand.u32 %v1579, 4294901760
    %1871 = vmatpush1.msra.mxu0 %v1870
    %1872 = vmatprep.subr.mxu0 0.0
    %v1873 = vand.u32 %v1578, 4294901760
    %1874 = vmatpush1.msra.mxu0 %v1873
    %1875 = vmatprep.subr.mxu0 0.0
    %v1876 = vand.u32 %v1577, 4294901760
    %1877 = vmatpush1.msra.mxu0 %v1876
    %1878 = vmatprep.subr.mxu0 0.0
    %1879 = vmatpush2.msra.mxu0 0.0
    %1880 = vmatprep.subr.mxu0 0.0
    %1881 = vmatpush2.msra.mxu0 0.0
    %1882 = vmatprep.subr.mxu0 0.0
    %1883 = vmatpush2.msra.mxu0 0.0
    %1884 = vmatprep.subr.mxu0 0.0
    %1885 = vmatpush2.msra.mxu0 0.0
    %1886 = vmatprep.subr.mxu0 0.0
    %1887 = vmatpush2.msra.mxu0 0.0
    %1888 = vmatprep.subr.mxu0 0.0
    %1889 = vmatpush2.msra.mxu0 0.0
    %1890 = vmatprep.subr.mxu0 0.0
    %1891 = vmatpush2.msra.mxu0 0.0
    %1892 = vmatprep.subr.mxu0 0.0
    %1893 = vmatpush2.msra.mxu0 0.0
    %1894 = vmatprep.subr.mxu0 0.0
    %1895 = vmatpush2.msra.mxu0 0.0
    %1896 = vmatprep.subr.mxu0 0.0
    %1897 = vmatpush2.msra.mxu0 0.0
    %1898 = vmatprep.subr.mxu0 0.0
    %1899 = vmatpush2.msra.mxu0 0.0
    %1900 = vmatprep.subr.mxu0 0.0
    %1901 = vmatpush2.msra.mxu0 0.0
    %1902 = vmatprep.subr.mxu0 0.0
    %1903 = vmatpush2.msra.mxu0 0.0
    %1904 = vmatprep.subr.mxu0 0.0
    %1905 = vmatpush2.msra.mxu0 0.0
    %1906 = vmatprep.subr.mxu0 0.0
    %1907 = vmatpush2.msra.mxu0 0.0
    %1908 = vmatprep.subr.mxu0 0.0
    %1909 = vmatpush2.msra.mxu0 0.0
    %1910 = vmatprep.mubr.f32.mxu0 0.0
    %v1911 = vand.u32 %v1590, 4294901760
    %v1912 = vsub.f32 %v1590, %v1911
    %v1913 = vand.u32 %v1912, 4294901760
    %1914 = vmatmul.mubr.f32.gmra.mxu0 %v1913
    %v1915 = vpop.f32.mrf.mxu0
    %v1916 = vadd.f32 %v1839, %v1915
    %v1917 = vpop.f32.mrf.mxu0
    %1918 = vdwg.mxu0
    %1919 = vmatprep.subr.mxu0 0.0
    %1920 = vmatpush1.msra.mxu0 0.0
    %1921 = vmatprep.subr.mxu0 0.0
    %1922 = vmatpush1.msra.mxu0 0.0
    %1923 = vmatprep.subr.mxu0 0.0
    %1924 = vmatpush1.msra.mxu0 0.0
    %1925 = vmatprep.subr.mxu0 0.0
    %1926 = vmatpush1.msra.mxu0 0.0
    %1927 = vmatprep.subr.mxu0 0.0
    %1928 = vmatpush1.msra.mxu0 0.0
    %1929 = vmatprep.subr.mxu0 0.0
    %1930 = vmatpush1.msra.mxu0 0.0
    %1931 = vmatprep.subr.mxu0 0.0
    %1932 = vmatpush1.msra.mxu0 0.0
    %1933 = vmatprep.subr.mxu0 0.0
    %1934 = vmatpush1.msra.mxu0 0.0
    %1935 = vmatprep.subr.mxu0 0.0
    %1936 = vmatpush1.msra.mxu0 0.0
    %1937 = vmatprep.subr.mxu0 0.0
    %1938 = vmatpush1.msra.mxu0 0.0
    %1939 = vmatprep.subr.mxu0 0.0
    %1940 = vmatpush1.msra.mxu0 0.0
    %1941 = vmatprep.subr.mxu0 0.0
    %1942 = vmatpush1.msra.mxu0 0.0
    %1943 = vmatprep.subr.mxu0 0.0
    %v1944 = vand.u32 %v1580, 4294901760
    %v1945 = vsub.f32 %v1580, %v1944
    %v1946 = vand.u32 %v1945, 4294901760
    %1947 = vmatpush1.msra.mxu0 %v1946
    %1948 = vmatprep.subr.mxu0 0.0
    %v1949 = vand.u32 %v1579, 4294901760
    %v1950 = vsub.f32 %v1579, %v1949
    %v1951 = vand.u32 %v1950, 4294901760
    %1952 = vmatpush1.msra.mxu0 %v1951
    %1953 = vmatprep.subr.mxu0 0.0
    %v1954 = vand.u32 %v1578, 4294901760
    %v1955 = vsub.f32 %v1578, %v1954
    %v1956 = vand.u32 %v1955, 4294901760
    %1957 = vmatpush1.msra.mxu0 %v1956
    %1958 = vmatprep.subr.mxu0 0.0
    %v1959 = vand.u32 %v1577, 4294901760
    %v1960 = vsub.f32 %v1577, %v1959
    %v1961 = vand.u32 %v1960, 4294901760
    %1962 = vmatpush1.msra.mxu0 %v1961
    %1963 = vmatprep.subr.mxu0 0.0
    %1964 = vmatpush2.msra.mxu0 0.0
    %1965 = vmatprep.subr.mxu0 0.0
    %1966 = vmatpush2.msra.mxu0 0.0
    %1967 = vmatprep.subr.mxu0 0.0
    %1968 = vmatpush2.msra.mxu0 0.0
    %1969 = vmatprep.subr.mxu0 0.0
    %1970 = vmatpush2.msra.mxu0 0.0
    %1971 = vmatprep.subr.mxu0 0.0
    %1972 = vmatpush2.msra.mxu0 0.0
    %1973 = vmatprep.subr.mxu0 0.0
    %1974 = vmatpush2.msra.mxu0 0.0
    %1975 = vmatprep.subr.mxu0 0.0
    %1976 = vmatpush2.msra.mxu0 0.0
    %1977 = vmatprep.subr.mxu0 0.0
    %1978 = vmatpush2.msra.mxu0 0.0
    %1979 = vmatprep.subr.mxu0 0.0
    %1980 = vmatpush2.msra.mxu0 0.0
    %1981 = vmatprep.subr.mxu0 0.0
    %1982 = vmatpush2.msra.mxu0 0.0
    %1983 = vmatprep.subr.mxu0 0.0
    %1984 = vmatpush2.msra.mxu0 0.0
    %1985 = vmatprep.subr.mxu0 0.0
    %1986 = vmatpush2.msra.mxu0 0.0
    %1987 = vmatprep.subr.mxu0 0.0
    %1988 = vmatpush2.msra.mxu0 0.0
    %1989 = vmatprep.subr.mxu0 0.0
    %1990 = vmatpush2.msra.mxu0 0.0
    %1991 = vmatprep.subr.mxu0 0.0
    %1992 = vmatpush2.msra.mxu0 0.0
    %1993 = vmatprep.subr.mxu0 0.0
    %1994 = vmatpush2.msra.mxu0 0.0
    %1995 = vmatprep.mubr.f32.mxu0 0.0
    %v1996 = vand.u32 %v1590, 4294901760
    %1997 = vmatmul.mubr.f32.gmra.mxu0 %v1996
    %v1998 = vpop.f32.mrf.mxu0
    %v1999 = vadd.f32 %v1916, %v1998
    %v2000 = vpop.f32.mrf.mxu0
    %2001 = vdwg.mxu0
    %2002 = vmatprep.subr.mxu0 0.0
    %2003 = vmatpush1.msra.mxu0 0.0
    %2004 = vmatprep.subr.mxu0 0.0
    %2005 = vmatpush1.msra.mxu0 0.0
    %2006 = vmatprep.subr.mxu0 0.0
    %2007 = vmatpush1.msra.mxu0 0.0
    %2008 = vmatprep.subr.mxu0 0.0
    %2009 = vmatpush1.msra.mxu0 0.0
    %2010 = vmatprep.subr.mxu0 0.0
    %2011 = vmatpush1.msra.mxu0 0.0
    %2012 = vmatprep.subr.mxu0 0.0
    %2013 = vmatpush1.msra.mxu0 0.0
    %2014 = vmatprep.subr.mxu0 0.0
    %2015 = vmatpush1.msra.mxu0 0.0
    %2016 = vmatprep.subr.mxu0 0.0
    %2017 = vmatpush1.msra.mxu0 0.0
    %2018 = vmatprep.subr.mxu0 0.0
    %2019 = vmatpush1.msra.mxu0 0.0
    %2020 = vmatprep.subr.mxu0 0.0
    %2021 = vmatpush1.msra.mxu0 0.0
    %2022 = vmatprep.subr.mxu0 0.0
    %2023 = vmatpush1.msra.mxu0 0.0
    %2024 = vmatprep.subr.mxu0 0.0
    %2025 = vmatpush1.msra.mxu0 0.0
    %2026 = vmatprep.subr.mxu0 0.0
    %v2027 = vand.u32 %v1580, 4294901760
    %2028 = vmatpush1.msra.mxu0 %v2027
    %2029 = vmatprep.subr.mxu0 0.0
    %v2030 = vand.u32 %v1579, 4294901760
    %2031 = vmatpush1.msra.mxu0 %v2030
    %2032 = vmatprep.subr.mxu0 0.0
    %v2033 = vand.u32 %v1578, 4294901760
    %2034 = vmatpush1.msra.mxu0 %v2033
    %2035 = vmatprep.subr.mxu0 0.0
    %v2036 = vand.u32 %v1577, 4294901760
    %2037 = vmatpush1.msra.mxu0 %v2036
    %2038 = vmatprep.subr.mxu0 0.0
    %2039 = vmatpush2.msra.mxu0 0.0
    %2040 = vmatprep.subr.mxu0 0.0
    %2041 = vmatpush2.msra.mxu0 0.0
    %2042 = vmatprep.subr.mxu0 0.0
    %2043 = vmatpush2.msra.mxu0 0.0
    %2044 = vmatprep.subr.mxu0 0.0
    %2045 = vmatpush2.msra.mxu0 0.0
    %2046 = vmatprep.subr.mxu0 0.0
    %2047 = vmatpush2.msra.mxu0 0.0
    %2048 = vmatprep.subr.mxu0 0.0
    %2049 = vmatpush2.msra.mxu0 0.0
    %2050 = vmatprep.subr.mxu0 0.0
    %2051 = vmatpush2.msra.mxu0 0.0
    %2052 = vmatprep.subr.mxu0 0.0
    %2053 = vmatpush2.msra.mxu0 0.0
    %2054 = vmatprep.subr.mxu0 0.0
    %2055 = vmatpush2.msra.mxu0 0.0
    %2056 = vmatprep.subr.mxu0 0.0
    %2057 = vmatpush2.msra.mxu0 0.0
    %2058 = vmatprep.subr.mxu0 0.0
    %2059 = vmatpush2.msra.mxu0 0.0
    %2060 = vmatprep.subr.mxu0 0.0
    %2061 = vmatpush2.msra.mxu0 0.0
    %2062 = vmatprep.subr.mxu0 0.0
    %2063 = vmatpush2.msra.mxu0 0.0
    %2064 = vmatprep.subr.mxu0 0.0
    %2065 = vmatpush2.msra.mxu0 0.0
    %2066 = vmatprep.subr.mxu0 0.0
    %2067 = vmatpush2.msra.mxu0 0.0
    %2068 = vmatprep.subr.mxu0 0.0
    %2069 = vmatpush2.msra.mxu0 0.0
    %2070 = vmatprep.mubr.f32.mxu0 0.0
    %v2071 = vand.u32 %v1590, 4294901760
    %2072 = vmatmul.mubr.f32.gmra.mxu0 %v2071
    %v2073 = vpop.f32.mrf.mxu0
    %v2074 = vadd.f32 %v1999, %v2073
    %v2075 = vpop.f32.mrf.mxu0
    %2076 = vdwg.mxu0
    %2077 = vst [vmem:[#allocation2] sm:$0xff] %v2074
    // Predicated region
    $region30: #{time_embedding_forward_padded.1} parent=1 // pred_check
      _
    $region31: #{time_embedding_forward_padded.1} parent=1 // pred_check_branch
      %2079 = sbr.rel (0) target = $region33
    $region32: #{time_embedding_forward_padded.1} parent=1 // pred_region
      %s2081 = ssub.s32 128, 128
      %2082 = vsyncadd [#allocation3], %s2081
      %s2084 = sshll.u32 [#allocation2], 4
      %s2085 = int_to_ptr.vmem [resolvable:$true] %s2084
      %2087 = dma.vmem_to_hbm [thread:$0]  %s2085, 128, %s7, [#allocation3]
    $region33: #{time_embedding_forward_padded.1} parent=1 // pred_fallthru
      _
    // Predicated region
    $region34: #{time_embedding_forward_padded.1} parent=1 // pred_check
      _
    $region35: #{time_embedding_forward_padded.1} parent=1 // pred_check_branch
      %2089 = sbr.rel (0) target = $region37
    $region36: #{time_embedding_forward_padded.1} parent=1 // pred_region
      %2090 = dma.done [#allocation3], 128
    $region37: #{time_embedding_forward_padded.1} parent=1 // pred_fallthru
      _
    %2091 = vsyncpa [#allocation3], 1

</llo_original>
